<compile_context>
chip_gen: v7x
topology: tpu7x:2x2x1
jax: 0.10.0
libtpu: 0.0.40
codegen_flags: <defaults>
</compile_context>

<pallas_src>
import functools

import jax
import jax.numpy as jnp
from jax import lax
from jax.experimental import pallas as pl
from jax.experimental.pallas import tpu as pltpu


# tap index -> (phase, offset) for a k=3 / stride=2 / pad=1 conv reading a phase-decomposed
# padded image: phase 0 holds even coordinates (index i <-> coord 2i), phase 1 holds odd
# coordinates with a leading zero row/col standing in for coordinate -1 (index i <-> 2i-1).
_TAP_PHASE = ((1, 0), (0, 0), (1, 1))


# ------------------------------ fused Pallas kernel ------------------------------ #
def _fused_disc_kernel(p1_ref, w1_ref, b1_ref, w2_ref, b2_ref, wf_ref, bf_ref,
                       out_ref, ph_ref, *, batch):
    B = batch

    # ---- conv1: (B*64, 9*Cin) @ (9*Cin, 8) + bias, LeakyReLU(0.2).  bf16 in, f32 acc.
    y1 = jnp.dot(p1_ref[...], w1_ref[...], preferred_element_type=jnp.float32)
    y1 = y1 + b1_ref[...]
    y1 = jnp.where(y1 >= 0.0, y1, 0.2 * y1)          # (B*64, 8) f32, rows (b, ho, wo&1, wo>>1)

    # ---- Scatter conv1's output into the zero-padded, phase-decomposed VMEM scratch.
    # ph_ref[(rp*2 + cp)*B + b] is the (row-phase rp, col-phase cp) image of shape (5, 5, 8):
    #   even phase: indices 0..3 hold coords 0,2,4,6      (index 4 stays zero)
    #   odd  phase: index 0 stays zero (coord -1 = pad), indices 1..4 hold coords 1,3,5,7
    ph_ref[...] = jnp.zeros_like(ph_ref)
    for b in range(B):
        for ho in range(8):
            rp = ho & 1
            rdst = ho // 2 + rp                      # even: ho//2 ; odd: (ho+1)//2
            for cp in range(2):
                r0 = b * 64 + ho * 8 + cp * 4        # 4 contiguous rows: wo = cp, cp+2, cp+4, cp+6
                ph_ref[(rp * 2 + cp) * B + b, rdst, pl.ds(cp, 4), :] = y1[r0:r0 + 4, :]

    # ---- conv2: in-VMEM im2col (k3 s2 p1 on 8x8 -> 4x4) + one GEMM + bias + LeakyReLU.
    w2 = w2_ref[...]                                 # (72, 16) bf16
    b2 = b2_ref[...]                                 # (1, 16)  f32
    blocks = []
    for b in range(B):
        for ho2 in range(4):
            taps = []
            for ki in range(3):
                rp, ro = _TAP_PHASE[ki]
                for kj in range(3):
                    cp, co = _TAP_PHASE[kj]
                    taps.append(ph_ref[(rp * 2 + cp) * B + b, ro + ho2, pl.ds(co, 4), :])
            blocks.append(jnp.concatenate(taps, axis=1))        # (4, 72): features (ki, kj, ci)
    p2 = jnp.concatenate(blocks, axis=0)                        # (B*16, 72): rows (b, ho2, wo2)
    y2 = jnp.dot(p2.astype(jnp.bfloat16), w2, preferred_element_type=jnp.float32) + b2
    y2 = jnp.where(y2 >= 0.0, y2, 0.2 * y2)                     # (B*16, 16) f32

    # ---- conv3 (4x4 linear) folded with the dense head:
    #      out[b] = sum_{h,w,c} y2[b, h, w, c] * Wf[h*4 + w, c] + bf
    wf = wf_ref[...]                                            # (16, 16) f32
    bf = bf_ref[...]                                            # (1, 1)   f32
    for b in range(B):
        blk = y2[b * 16:(b + 1) * 16, :] * wf                   # (16, 16)
        s = jnp.sum(blk, axis=0, keepdims=True)                 # (1, 16)
        s = jnp.sum(s, axis=1, keepdims=True)                   # (1, 1)
        out_ref[pl.ds(b, 1), :] = (s + bf).astype(out_ref.dtype)


def _fused_pallas_call(p1, w1m, b1r, w2m, b2r, wf, bfold, batch):
    kern = functools.partial(_fused_disc_kernel, batch=batch)

    def full(shape):
        return pl.BlockSpec(shape, lambda i: (0,) * len(shape))

    return pl.pallas_call(
        kern,
        out_shape=jax.ShapeDtypeStruct((batch, 1), jnp.float32),
        # Everything fits in VMEM at these shapes -> single grid step, full-array blocks.
        # TODO(synk): for large batch, tile the batch dim with a "parallel" grid axis
        # (uses both v7x TensorCores) and re-derive block sizes for v7x's 64 MiB VMEM.
        grid=(1,),
        in_specs=[full(p1.shape), full(w1m.shape), full(b1r.shape),
                  full(w2m.shape), full(b2r.shape), full(wf.shape), full(bfold.shape)],
        out_specs=pl.BlockSpec((batch, 1), lambda i: (0, 0)),
        scratch_shapes=[pltpu.VMEM((4 * batch, 5, 5, 8), jnp.float32)],
        compiler_params=pltpu.CompilerParams(dimension_semantics=("arbitrary",)),
    )(p1, w1m, b1r, w2m, b2r, wf, bfold)


# --------------------------------- XLA-side glue --------------------------------- #
def _im2col_conv1(x):
    """(B, C, 16, 16) NCHW -> (B*64, 9*C) bf16 patch matrix for conv1 (k3, s2, p1).

    Rows ordered (b, ho, wo&1, wo>>1): the column-parity split makes the in-kernel phase
    scatter (needed for conv2's stride-2 reads) a set of contiguous, stride-free slices.
    Features ordered (ki, kj, ci) to match the reshaped conv weights."""
    B, C, H, W = x.shape
    xp = jnp.pad(x, ((0, 0), (0, 0), (1, 1), (1, 1)))
    taps = [xp[:, :, ki:ki + 16:2, kj:kj + 16:2]       # (B, C, 8, 8) each
            for ki in range(3) for kj in range(3)]
    t = jnp.stack(taps, axis=0)                        # (9, B, C, 8, 8) = (tap, b, c, ho, wo)
    t = t.reshape(9, B, C, 8, 4, 2)                    # wo -> (wo2, cp):  wo = 2*wo2 + cp
    t = t.transpose(1, 3, 5, 4, 0, 2)                  # (b, ho, cp, wo2, tap, c)
    return t.reshape(B * 64, 9 * C).astype(jnp.bfloat16)


@jax.jit
def _discriminator_forward(image, w1m, b1r, w2m, b2r, wf, bfold):
    B = image.shape[0]
    p1 = _im2col_conv1(image)
    return _fused_pallas_call(p1, w1m, b1r, w2m, b2r, wf, bfold, B)


# -------------------------------- the discriminator ------------------------------ #
class BaseImageDiscriminatorPallas:
    """Pallas-TPU forward for BaseImageDiscriminator (DCGAN-style instantiation)."""

    def __init__(self, input_shape, fc_in=32, wasserstein=False, logits=True, seed=0):
        self.input_shape = self.image_shape = input_shape    # (C, H, W)
        self.fc_in = fc_in
        self.wasserstein = wasserstein
        self.logits = logits

        C, H, W = input_shape
        assert (H, W) == (16, 16), "conv3 (4x4, no pad) assumes 16x16 inputs -> 1x1 spatial"

        ks = jax.random.split(jax.random.PRNGKey(seed), 4)

        def winit(k, shape, fan_in):
            return jax.random.normal(k, shape, jnp.float32) / jnp.sqrt(fan_in)

        # PyTorch-layout parameters (kept for the pure-JAX reference / introspection).
        self.w1 = winit(ks[0], (8, C, 3, 3), C * 9)          # Conv2d(C, 8, 3, s2, p1)
        self.b1 = jnp.zeros((8,), jnp.float32)
        self.w2 = winit(ks[1], (16, 8, 3, 3), 8 * 9)         # Conv2d(8, 16, 3, s2, p1)
        self.b2 = jnp.zeros((16,), jnp.float32)
        self.w3 = winit(ks[2], (fc_in, 16, 4, 4), 16 * 16)   # Conv2d(16, fc_in, 4, s1, p0)
        self.b3 = jnp.zeros((fc_in,), jnp.float32)
        self.wd = winit(ks[3], (1, fc_in), fc_in)            # Linear(fc_in, 1)
        self.bd = jnp.zeros((1,), jnp.float32)

        # ---- kernel-ready parameters (precomputed once) ----
        # conv weights as (kh*kw*Cin, Cout) GEMM operands, bf16 for native MXU rate.
        self.w1m = self.w1.transpose(2, 3, 1, 0).reshape(9 * C, 8).astype(jnp.bfloat16)
        self.w2m = self.w2.transpose(2, 3, 1, 0).reshape(9 * 8, 16).astype(jnp.bfloat16)
        self.b1r = self.b1.reshape(1, 8)
        self.b2r = self.b2.reshape(1, 16)
        # conv3 and dense are both linear -> fold: Wf[h*4+w, ci] = sum_co Wd[0,co]*W3[co,ci,h,w]
        self.wf = jnp.einsum("o,ochw->hwc", self.wd[0], self.w3).reshape(16, 16)
        self.bf = (self.wd @ self.b3 + self.bd).reshape(1, 1)
        # TODO(synk): logits=False (final sigmoid) / wasserstein-specific paths not implemented.

    def forward(self, *image):
        image, = image
        assert tuple(image.shape[1:]) == tuple(self.input_shape)
        out = _discriminator_forward(image, self.w1m, self.b1r, self.w2m, self.b2r,
                                     self.wf, self.bf)
        assert out.shape[0] == image.shape[0]     # mirrors the x.view(-1, fc_in) assert
        return out

    __call__ = forward


# ------------------------------ pure-JAX reference ------------------------------- #
def _reference_forward(disc, image):
    """f32 XLA reference with identical semantics (for validation only)."""
    dn = ("NCHW", "OIHW", "NCHW")
    lrelu = lambda v: jnp.where(v >= 0.0, v, 0.2 * v)
    x = lax.conv_general_dilated(image, disc.w1, (2, 2), [(1, 1), (1, 1)], dimension_numbers=dn)
    x = lrelu(x + disc.b1.reshape(1, -1, 1, 1))
    x = lax.conv_general_dilated(x, disc.w2, (2, 2), [(1, 1), (1, 1)], dimension_numbers=dn)
    x = lrelu(x + disc.b2.reshape(1, -1, 1, 1))
    x = lax.conv_general_dilated(x, disc.w3, (1, 1), [(0, 0), (0, 0)], dimension_numbers=dn)
    x = (x + disc.b3.reshape(1, -1, 1, 1)).reshape(-1, disc.fc_in)
    return x @ disc.wd.T + disc.bd


# -------------------------------------- main -------------------------------------- #
if __name__ == "__main__":
    B, C, H, W = 2, 4, 16, 16
    image = jax.random.normal(jax.random.PRNGKey(0), (B, C, H, W), jnp.float32)   # NCHW

    disc = BaseImageDiscriminatorPallas(input_shape=(C, H, W), fc_in=32)
    out = jax.block_until_ready(disc(image))

    assert out.shape == (B, 1), out.shape
    assert out.dtype == jnp.float32

    ref = _reference_forward(disc, image)
    # bf16 MXU operands with f32 accumulation -> small rounding delta vs. the f32 reference.
    assert jnp.allclose(out, ref, rtol=1e-1, atol=1e-1), (out, ref)

    print("KERNEL_OK")
</pallas_src>

<mosaic_0001>
module attributes {stable_mosaic.version = 11 : i64} {
  func.func @_fused_disc_kernel(%arg0: i32, %arg1: memref<128x36xbf16, #tpu.memory_space<vmem>>, %arg2: memref<36x8xbf16, #tpu.memory_space<vmem>>, %arg3: memref<1x8xf32, #tpu.memory_space<vmem>>, %arg4: memref<72x16xbf16, #tpu.memory_space<vmem>>, %arg5: memref<1x16xf32, #tpu.memory_space<vmem>>, %arg6: memref<16x16xf32, #tpu.memory_space<vmem>>, %arg7: memref<1x1xf32, #tpu.memory_space<vmem>>, %arg8: memref<2x1xf32, #tpu.memory_space<vmem>>, %arg9: memref<8x5x5x8xf32, #tpu.memory_space<vmem>>) attributes {dimension_semantics = [#tpu.dimension_semantics<arbitrary>], iteration_bounds = array<i64: 1>, scalar_prefetch = 0 : i64, scratch_operands = 1 : i64, tpu.core_type = #tpu.core_type<tc>, window_params = [{pipeline_mode = #tpu.pipeline_mode<synchronous>, transform_indices = @transform_0, window_bounds = array<i64: 128, 36>}, {pipeline_mode = #tpu.pipeline_mode<synchronous>, transform_indices = @transform_1, window_bounds = array<i64: 36, 8>}, {pipeline_mode = #tpu.pipeline_mode<synchronous>, transform_indices = @transform_2, window_bounds = array<i64: 1, 8>}, {pipeline_mode = #tpu.pipeline_mode<synchronous>, transform_indices = @transform_3, window_bounds = array<i64: 72, 16>}, {pipeline_mode = #tpu.pipeline_mode<synchronous>, transform_indices = @transform_4, window_bounds = array<i64: 1, 16>}, {pipeline_mode = #tpu.pipeline_mode<synchronous>, transform_indices = @transform_5, window_bounds = array<i64: 16, 16>}, {pipeline_mode = #tpu.pipeline_mode<synchronous>, transform_indices = @transform_6, window_bounds = array<i64: 1, 1>}, {pipeline_mode = #tpu.pipeline_mode<synchronous>, transform_indices = @transform_7, window_bounds = array<i64: 2, 1>}]} {
    %c0 = arith.constant 0 : index
    %c0_0 = arith.constant 0 : index
    %0 = vector.load %arg1[%c0, %c0_0] : memref<128x36xbf16, #tpu.memory_space<vmem>>, vector<128x36xbf16>
    %c0_1 = arith.constant 0 : index
    %c0_2 = arith.constant 0 : index
    %1 = vector.load %arg2[%c0_1, %c0_2] : memref<36x8xbf16, #tpu.memory_space<vmem>>, vector<36x8xbf16>
    %cst = arith.constant dense<0.000000e+00> : vector<128x8xf32>
    %2 = tpu.matmul %0, %1, %cst {dimension_numbers = #tpu.dot_dimension_numbers<[1], [0], [0], [1], [0, 0, 1, 1], [], []>} : vector<128x36xbf16>, vector<36x8xbf16>, vector<128x8xf32> -> vector<128x8xf32>
    %c0_3 = arith.constant 0 : index
    %c0_4 = arith.constant 0 : index
    %3 = vector.load %arg3[%c0_3, %c0_4] : memref<1x8xf32, #tpu.memory_space<vmem>>, vector<1x8xf32>
    %4 = vector.broadcast %3 : vector<1x8xf32> to vector<128x8xf32>
    %5 = arith.addf %2, %4 : vector<128x8xf32>
    %cst_5 = arith.constant 0.000000e+00 : f32
    %6 = vector.broadcast %cst_5 : f32 to vector<128x8xf32>
    %7 = arith.cmpf oge, %5, %6 : vector<128x8xf32>
    %cst_6 = arith.constant 2.000000e-01 : f32
    %8 = vector.broadcast %cst_6 : f32 to vector<128x8xf32>
    %9 = arith.mulf %8, %5 : vector<128x8xf32>
    %10 = arith.select %7, %5, %9 : vector<128x8xi1>, vector<128x8xf32>
    %cst_7 = arith.constant 0.000000e+00 : f32
    %11 = vector.broadcast %cst_7 : f32 to vector<8x5x5x8xf32>
    %c0_8 = arith.constant 0 : index
    %c0_9 = arith.constant 0 : index
    %c0_10 = arith.constant 0 : index
    %c0_11 = arith.constant 0 : index
    %12 = vector.load %arg9[%c0_8, %c0_9, %c0_10, %c0_11] : memref<8x5x5x8xf32, #tpu.memory_space<vmem>>, vector<8x5x5x8xf32>
    tpu.vector_store %arg9[%c0_8, %c0_9, %c0_10, %c0_11], %11 {strides = array<i32>} : memref<8x5x5x8xf32, #tpu.memory_space<vmem>>, vector<8x5x5x8xf32>,
    %13 = vector.extract_strided_slice %10 {offsets = [0, 0], sizes = [4, 8], strides = [1, 1]} : vector<128x8xf32> to vector<4x8xf32>
    %c0_12 = arith.constant 0 : index
    %c0_13 = arith.constant 0 : index
    %c0_14 = arith.constant 0 : index
    %c0_15 = arith.constant 0 : index
    %14 = vector.load %arg9[%c0_12, %c0_13, %c0_14, %c0_15] : memref<8x5x5x8xf32, #tpu.memory_space<vmem>>, vector<1x1x4x8xf32>
    %15 = vector.shape_cast %14 : vector<1x1x4x8xf32> to vector<4x8xf32>
    %16 = vector.shape_cast %13 : vector<4x8xf32> to vector<1x1x4x8xf32>
    tpu.vector_store %arg9[%c0_12, %c0_13, %c0_14, %c0_15], %16 {strides = array<i32>} : memref<8x5x5x8xf32, #tpu.memory_space<vmem>>, vector<1x1x4x8xf32>,
    %17 = vector.extract_strided_slice %10 {offsets = [4, 0], sizes = [4, 8], strides = [1, 1]} : vector<128x8xf32> to vector<4x8xf32>
    %c2 = arith.constant 2 : index
    %c0_16 = arith.constant 0 : index
    %c1 = arith.constant 1 : index
    %c0_17 = arith.constant 0 : index
    %18 = vector.load %arg9[%c2, %c0_16, %c1, %c0_17] : memref<8x5x5x8xf32, #tpu.memory_space<vmem>>, vector<1x1x4x8xf32>
    %19 = vector.shape_cast %18 : vector<1x1x4x8xf32> to vector<4x8xf32>
    %20 = vector.shape_cast %17 : vector<4x8xf32> to vector<1x1x4x8xf32>
    tpu.vector_store %arg9[%c2, %c0_16, %c1, %c0_17], %20 {strides = array<i32>} : memref<8x5x5x8xf32, #tpu.memory_space<vmem>>, vector<1x1x4x8xf32>,
    %21 = vector.extract_strided_slice %10 {offsets = [8, 0], sizes = [4, 8], strides = [1, 1]} : vector<128x8xf32> to vector<4x8xf32>
    %c4 = arith.constant 4 : index
    %c1_18 = arith.constant 1 : index
    %c0_19 = arith.constant 0 : index
    %c0_20 = arith.constant 0 : index
    %22 = vector.load %arg9[%c4, %c1_18, %c0_19, %c0_20] : memref<8x5x5x8xf32, #tpu.memory_space<vmem>>, vector<1x1x4x8xf32>
    %23 = vector.shape_cast %22 : vector<1x1x4x8xf32> to vector<4x8xf32>
    %24 = vector.shape_cast %21 : vector<4x8xf32> to vector<1x1x4x8xf32>
    tpu.vector_store %arg9[%c4, %c1_18, %c0_19, %c0_20], %24 {strides = array<i32>} : memref<8x5x5x8xf32, #tpu.memory_space<vmem>>, vector<1x1x4x8xf32>,
    %25 = vector.extract_strided_slice %10 {offsets = [12, 0], sizes = [4, 8], strides = [1, 1]} : vector<128x8xf32> to vector<4x8xf32>
    %c6 = arith.constant 6 : index
    %c1_21 = arith.constant 1 : index
    %c1_22 = arith.constant 1 : index
    %c0_23 = arith.constant 0 : index
    %26 = vector.load %arg9[%c6, %c1_21, %c1_22, %c0_23] : memref<8x5x5x8xf32, #tpu.memory_space<vmem>>, vector<1x1x4x8xf32>
    %27 = vector.shape_cast %26 : vector<1x1x4x8xf32> to vector<4x8xf32>
    %28 = vector.shape_cast %25 : vector<4x8xf32> to vector<1x1x4x8xf32>
    tpu.vector_store %arg9[%c6, %c1_21, %c1_22, %c0_23], %28 {strides = array<i32>} : memref<8x5x5x8xf32, #tpu.memory_space<vmem>>, vector<1x1x4x8xf32>,
    %29 = vector.extract_strided_slice %10 {offsets = [16, 0], sizes = [4, 8], strides = [1, 1]} : vector<128x8xf32> to vector<4x8xf32>
    %c0_24 = arith.constant 0 : index
    %c1_25 = arith.constant 1 : index
    %c0_26 = arith.constant 0 : index
    %c0_27 = arith.constant 0 : index
    %30 = vector.load %arg9[%c0_24, %c1_25, %c0_26, %c0_27] : memref<8x5x5x8xf32, #tpu.memory_space<vmem>>, vector<1x1x4x8xf32>
    %31 = vector.shape_cast %30 : vector<1x1x4x8xf32> to vector<4x8xf32>
    %32 = vector.shape_cast %29 : vector<4x8xf32> to vector<1x1x4x8xf32>
    tpu.vector_store %arg9[%c0_24, %c1_25, %c0_26, %c0_27], %32 {strides = array<i32>} : memref<8x5x5x8xf32, #tpu.memory_space<vmem>>, vector<1x1x4x8xf32>,
    %33 = vector.extract_strided_slice %10 {offsets = [20, 0], sizes = [4, 8], strides = [1, 1]} : vector<128x8xf32> to vector<4x8xf32>
    %c2_28 = arith.constant 2 : index
    %c1_29 = arith.constant 1 : index
    %c1_30 = arith.constant 1 : index
    %c0_31 = arith.constant 0 : index
    %34 = vector.load %arg9[%c2_28, %c1_29, %c1_30, %c0_31] : memref<8x5x5x8xf32, #tpu.memory_space<vmem>>, vector<1x1x4x8xf32>
    %35 = vector.shape_cast %34 : vector<1x1x4x8xf32> to vector<4x8xf32>
    %36 = vector.shape_cast %33 : vector<4x8xf32> to vector<1x1x4x8xf32>
    tpu.vector_store %arg9[%c2_28, %c1_29, %c1_30, %c0_31], %36 {strides = array<i32>} : memref<8x5x5x8xf32, #tpu.memory_space<vmem>>, vector<1x1x4x8xf32>,
    %37 = vector.extract_strided_slice %10 {offsets = [24, 0], sizes = [4, 8], strides = [1, 1]} : vector<128x8xf32> to vector<4x8xf32>
    %c4_32 = arith.constant 4 : index
    %c2_33 = arith.constant 2 : index
    %c0_34 = arith.constant 0 : index
    %c0_35 = arith.constant 0 : index
    %38 = vector.load %arg9[%c4_32, %c2_33, %c0_34, %c0_35] : memref<8x5x5x8xf32, #tpu.memory_space<vmem>>, vector<1x1x4x8xf32>
    %39 = vector.shape_cast %38 : vector<1x1x4x8xf32> to vector<4x8xf32>
    %40 = vector.shape_cast %37 : vector<4x8xf32> to vector<1x1x4x8xf32>
    tpu.vector_store %arg9[%c4_32, %c2_33, %c0_34, %c0_35], %40 {strides = array<i32>} : memref<8x5x5x8xf32, #tpu.memory_space<vmem>>, vector<1x1x4x8xf32>,
    %41 = vector.extract_strided_slice %10 {offsets = [28, 0], sizes = [4, 8], strides = [1, 1]} : vector<128x8xf32> to vector<4x8xf32>
    %c6_36 = arith.constant 6 : index
    %c2_37 = arith.constant 2 : index
    %c1_38 = arith.constant 1 : index
    %c0_39 = arith.constant 0 : index
    %42 = vector.load %arg9[%c6_36, %c2_37, %c1_38, %c0_39] : memref<8x5x5x8xf32, #tpu.memory_space<vmem>>, vector<1x1x4x8xf32>
    %43 = vector.shape_cast %42 : vector<1x1x4x8xf32> to vector<4x8xf32>
    %44 = vector.shape_cast %41 : vector<4x8xf32> to vector<1x1x4x8xf32>
    tpu.vector_store %arg9[%c6_36, %c2_37, %c1_38, %c0_39], %44 {strides = array<i32>} : memref<8x5x5x8xf32, #tpu.memory_space<vmem>>, vector<1x1x4x8xf32>,
    %45 = vector.extract_strided_slice %10 {offsets = [32, 0], sizes = [4, 8], strides = [1, 1]} : vector<128x8xf32> to vector<4x8xf32>
    %c0_40 = arith.constant 0 : index
    %c2_41 = arith.constant 2 : index
    %c0_42 = arith.constant 0 : index
    %c0_43 = arith.constant 0 : index
    %46 = vector.load %arg9[%c0_40, %c2_41, %c0_42, %c0_43] : memref<8x5x5x8xf32, #tpu.memory_space<vmem>>, vector<1x1x4x8xf32>
    %47 = vector.shape_cast %46 : vector<1x1x4x8xf32> to vector<4x8xf32>
    %48 = vector.shape_cast %45 : vector<4x8xf32> to vector<1x1x4x8xf32>
    tpu.vector_store %arg9[%c0_40, %c2_41, %c0_42, %c0_43], %48 {strides = array<i32>} : memref<8x5x5x8xf32, #tpu.memory_space<vmem>>, vector<1x1x4x8xf32>,
    %49 = vector.extract_strided_slice %10 {offsets = [36, 0], sizes = [4, 8], strides = [1, 1]} : vector<128x8xf32> to vector<4x8xf32>
    %c2_44 = arith.constant 2 : index
    %c2_45 = arith.constant 2 : index
    %c1_46 = arith.constant 1 : index
    %c0_47 = arith.constant 0 : index
    %50 = vector.load %arg9[%c2_44, %c2_45, %c1_46, %c0_47] : memref<8x5x5x8xf32, #tpu.memory_space<vmem>>, vector<1x1x4x8xf32>
    %51 = vector.shape_cast %50 : vector<1x1x4x8xf32> to vector<4x8xf32>
    %52 = vector.shape_cast %49 : vector<4x8xf32> to vector<1x1x4x8xf32>
    tpu.vector_store %arg9[%c2_44, %c2_45, %c1_46, %c0_47], %52 {strides = array<i32>} : memref<8x5x5x8xf32, #tpu.memory_space<vmem>>, vector<1x1x4x8xf32>,
    %53 = vector.extract_strided_slice %10 {offsets = [40, 0], sizes = [4, 8], strides = [1, 1]} : vector<128x8xf32> to vector<4x8xf32>
    %c4_48 = arith.constant 4 : index
    %c3 = arith.constant 3 : index
    %c0_49 = arith.constant 0 : index
    %c0_50 = arith.constant 0 : index
    %54 = vector.load %arg9[%c4_48, %c3, %c0_49, %c0_50] : memref<8x5x5x8xf32, #tpu.memory_space<vmem>>, vector<1x1x4x8xf32>
    %55 = vector.shape_cast %54 : vector<1x1x4x8xf32> to vector<4x8xf32>
    %56 = vector.shape_cast %53 : vector<4x8xf32> to vector<1x1x4x8xf32>
    tpu.vector_store %arg9[%c4_48, %c3, %c0_49, %c0_50], %56 {strides = array<i32>} : memref<8x5x5x8xf32, #tpu.memory_space<vmem>>, vector<1x1x4x8xf32>,
    %57 = vector.extract_strided_slice %10 {offsets = [44, 0], sizes = [4, 8], strides = [1, 1]} : vector<128x8xf32> to vector<4x8xf32>
    %c6_51 = arith.constant 6 : index
    %c3_52 = arith.constant 3 : index
    %c1_53 = arith.constant 1 : index
    %c0_54 = arith.constant 0 : index
    %58 = vector.load %arg9[%c6_51, %c3_52, %c1_53, %c0_54] : memref<8x5x5x8xf32, #tpu.memory_space<vmem>>, vector<1x1x4x8xf32>
    %59 = vector.shape_cast %58 : vector<1x1x4x8xf32> to vector<4x8xf32>
    %60 = vector.shape_cast %57 : vector<4x8xf32> to vector<1x1x4x8xf32>
    tpu.vector_store %arg9[%c6_51, %c3_52, %c1_53, %c0_54], %60 {strides = array<i32>} : memref<8x5x5x8xf32, #tpu.memory_space<vmem>>, vector<1x1x4x8xf32>,
    %61 = vector.extract_strided_slice %10 {offsets = [48, 0], sizes = [4, 8], strides = [1, 1]} : vector<128x8xf32> to vector<4x8xf32>
    %c0_55 = arith.constant 0 : index
    %c3_56 = arith.constant 3 : index
    %c0_57 = arith.constant 0 : index
    %c0_58 = arith.constant 0 : index
    %62 = vector.load %arg9[%c0_55, %c3_56, %c0_57, %c0_58] : memref<8x5x5x8xf32, #tpu.memory_space<vmem>>, vector<1x1x4x8xf32>
    %63 = vector.shape_cast %62 : vector<1x1x4x8xf32> to vector<4x8xf32>
    %64 = vector.shape_cast %61 : vector<4x8xf32> to vector<1x1x4x8xf32>
    tpu.vector_store %arg9[%c0_55, %c3_56, %c0_57, %c0_58], %64 {strides = array<i32>} : memref<8x5x5x8xf32, #tpu.memory_space<vmem>>, vector<1x1x4x8xf32>,
    %65 = vector.extract_strided_slice %10 {offsets = [52, 0], sizes = [4, 8], strides = [1, 1]} : vector<128x8xf32> to vector<4x8xf32>
    %c2_59 = arith.constant 2 : index
    %c3_60 = arith.constant 3 : index
    %c1_61 = arith.constant 1 : index
    %c0_62 = arith.constant 0 : index
    %66 = vector.load %arg9[%c2_59, %c3_60, %c1_61, %c0_62] : memref<8x5x5x8xf32, #tpu.memory_space<vmem>>, vector<1x1x4x8xf32>
    %67 = vector.shape_cast %66 : vector<1x1x4x8xf32> to vector<4x8xf32>
    %68 = vector.shape_cast %65 : vector<4x8xf32> to vector<1x1x4x8xf32>
    tpu.vector_store %arg9[%c2_59, %c3_60, %c1_61, %c0_62], %68 {strides = array<i32>} : memref<8x5x5x8xf32, #tpu.memory_space<vmem>>, vector<1x1x4x8xf32>,
    %69 = vector.extract_strided_slice %10 {offsets = [56, 0], sizes = [4, 8], strides = [1, 1]} : vector<128x8xf32> to vector<4x8xf32>
    %c4_63 = arith.constant 4 : index
    %c4_64 = arith.constant 4 : index
    %c0_65 = arith.constant 0 : index
    %c0_66 = arith.constant 0 : index
    %70 = vector.load %arg9[%c4_63, %c4_64, %c0_65, %c0_66] : memref<8x5x5x8xf32, #tpu.memory_space<vmem>>, vector<1x1x4x8xf32>
    %71 = vector.shape_cast %70 : vector<1x1x4x8xf32> to vector<4x8xf32>
    %72 = vector.shape_cast %69 : vector<4x8xf32> to vector<1x1x4x8xf32>
    tpu.vector_store %arg9[%c4_63, %c4_64, %c0_65, %c0_66], %72 {strides = array<i32>} : memref<8x5x5x8xf32, #tpu.memory_space<vmem>>, vector<1x1x4x8xf32>,
    %73 = vector.extract_strided_slice %10 {offsets = [60, 0], sizes = [4, 8], strides = [1, 1]} : vector<128x8xf32> to vector<4x8xf32>
    %c6_67 = arith.constant 6 : index
    %c4_68 = arith.constant 4 : index
    %c1_69 = arith.constant 1 : index
    %c0_70 = arith.constant 0 : index
    %74 = vector.load %arg9[%c6_67, %c4_68, %c1_69, %c0_70] : memref<8x5x5x8xf32, #tpu.memory_space<vmem>>, vector<1x1x4x8xf32>
    %75 = vector.shape_cast %74 : vector<1x1x4x8xf32> to vector<4x8xf32>
    %76 = vector.shape_cast %73 : vector<4x8xf32> to vector<1x1x4x8xf32>
    tpu.vector_store %arg9[%c6_67, %c4_68, %c1_69, %c0_70], %76 {strides = array<i32>} : memref<8x5x5x8xf32, #tpu.memory_space<vmem>>, vector<1x1x4x8xf32>,
    %77 = vector.extract_strided_slice %10 {offsets = [64, 0], sizes = [4, 8], strides = [1, 1]} : vector<128x8xf32> to vector<4x8xf32>
    %c1_71 = arith.constant 1 : index
    %c0_72 = arith.constant 0 : index
    %c0_73 = arith.constant 0 : index
    %c0_74 = arith.constant 0 : index
    %78 = vector.load %arg9[%c1_71, %c0_72, %c0_73, %c0_74] : memref<8x5x5x8xf32, #tpu.memory_space<vmem>>, vector<1x1x4x8xf32>
    %79 = vector.shape_cast %78 : vector<1x1x4x8xf32> to vector<4x8xf32>
    %80 = vector.shape_cast %77 : vector<4x8xf32> to vector<1x1x4x8xf32>
    tpu.vector_store %arg9[%c1_71, %c0_72, %c0_73, %c0_74], %80 {strides = array<i32>} : memref<8x5x5x8xf32, #tpu.memory_space<vmem>>, vector<1x1x4x8xf32>,
    %81 = vector.extract_strided_slice %10 {offsets = [68, 0], sizes = [4, 8], strides = [1, 1]} : vector<128x8xf32> to vector<4x8xf32>
    %c3_75 = arith.constant 3 : index
    %c0_76 = arith.constant 0 : index
    %c1_77 = arith.constant 1 : index
    %c0_78 = arith.constant 0 : index
    %82 = vector.load %arg9[%c3_75, %c0_76, %c1_77, %c0_78] : memref<8x5x5x8xf32, #tpu.memory_space<vmem>>, vector<1x1x4x8xf32>
    %83 = vector.shape_cast %82 : vector<1x1x4x8xf32> to vector<4x8xf32>
    %84 = vector.shape_cast %81 : vector<4x8xf32> to vector<1x1x4x8xf32>
    tpu.vector_store %arg9[%c3_75, %c0_76, %c1_77, %c0_78], %84 {strides = array<i32>} : memref<8x5x5x8xf32, #tpu.memory_space<vmem>>, vector<1x1x4x8xf32>,
    %85 = vector.extract_strided_slice %10 {offsets = [72, 0], sizes = [4, 8], strides = [1, 1]} : vector<128x8xf32> to vector<4x8xf32>
    %c5 = arith.constant 5 : index
    %c1_79 = arith.constant 1 : index
    %c0_80 = arith.constant 0 : index
    %c0_81 = arith.constant 0 : index
    %86 = vector.load %arg9[%c5, %c1_79, %c0_80, %c0_81] : memref<8x5x5x8xf32, #tpu.memory_space<vmem>>, vector<1x1x4x8xf32>
    %87 = vector.shape_cast %86 : vector<1x1x4x8xf32> to vector<4x8xf32>
    %88 = vector.shape_cast %85 : vector<4x8xf32> to vector<1x1x4x8xf32>
    tpu.vector_store %arg9[%c5, %c1_79, %c0_80, %c0_81], %88 {strides = array<i32>} : memref<8x5x5x8xf32, #tpu.memory_space<vmem>>, vector<1x1x4x8xf32>,
    %89 = vector.extract_strided_slice %10 {offsets = [76, 0], sizes = [4, 8], strides = [1, 1]} : vector<128x8xf32> to vector<4x8xf32>
    %c7 = arith.constant 7 : index
    %c1_82 = arith.constant 1 : index
    %c1_83 = arith.constant 1 : index
    %c0_84 = arith.constant 0 : index
    %90 = vector.load %arg9[%c7, %c1_82, %c1_83, %c0_84] : memref<8x5x5x8xf32, #tpu.memory_space<vmem>>, vector<1x1x4x8xf32>
    %91 = vector.shape_cast %90 : vector<1x1x4x8xf32> to vector<4x8xf32>
    %92 = vector.shape_cast %89 : vector<4x8xf32> to vector<1x1x4x8xf32>
    tpu.vector_store %arg9[%c7, %c1_82, %c1_83, %c0_84], %92 {strides = array<i32>} : memref<8x5x5x8xf32, #tpu.memory_space<vmem>>, vector<1x1x4x8xf32>,
    %93 = vector.extract_strided_slice %10 {offsets = [80, 0], sizes = [4, 8], strides = [1, 1]} : vector<128x8xf32> to vector<4x8xf32>
    %c1_85 = arith.constant 1 : index
    %c1_86 = arith.constant 1 : index
    %c0_87 = arith.constant 0 : index
    %c0_88 = arith.constant 0 : index
    %94 = vector.load %arg9[%c1_85, %c1_86, %c0_87, %c0_88] : memref<8x5x5x8xf32, #tpu.memory_space<vmem>>, vector<1x1x4x8xf32>
    %95 = vector.shape_cast %94 : vector<1x1x4x8xf32> to vector<4x8xf32>
    %96 = vector.shape_cast %93 : vector<4x8xf32> to vector<1x1x4x8xf32>
    tpu.vector_store %arg9[%c1_85, %c1_86, %c0_87, %c0_88], %96 {strides = array<i32>} : memref<8x5x5x8xf32, #tpu.memory_space<vmem>>, vector<1x1x4x8xf32>,
    %97 = vector.extract_strided_slice %10 {offsets = [84, 0], sizes = [4, 8], strides = [1, 1]} : vector<128x8xf32> to vector<4x8xf32>
    %c3_89 = arith.constant 3 : index
    %c1_90 = arith.constant 1 : index
    %c1_91 = arith.constant 1 : index
    %c0_92 = arith.constant 0 : index
    %98 = vector.load %arg9[%c3_89, %c1_90, %c1_91, %c0_92] : memref<8x5x5x8xf32, #tpu.memory_space<vmem>>, vector<1x1x4x8xf32>
    %99 = vector.shape_cast %98 : vector<1x1x4x8xf32> to vector<4x8xf32>
    %100 = vector.shape_cast %97 : vector<4x8xf32> to vector<1x1x4x8xf32>
    tpu.vector_store %arg9[%c3_89, %c1_90, %c1_91, %c0_92], %100 {strides = array<i32>} : memref<8x5x5x8xf32, #tpu.memory_space<vmem>>, vector<1x1x4x8xf32>,
    %101 = vector.extract_strided_slice %10 {offsets = [88, 0], sizes = [4, 8], strides = [1, 1]} : vector<128x8xf32> to vector<4x8xf32>
    %c5_93 = arith.constant 5 : index
    %c2_94 = arith.constant 2 : index
    %c0_95 = arith.constant 0 : index
    %c0_96 = arith.constant 0 : index
    %102 = vector.load %arg9[%c5_93, %c2_94, %c0_95, %c0_96] : memref<8x5x5x8xf32, #tpu.memory_space<vmem>>, vector<1x1x4x8xf32>
    %103 = vector.shape_cast %102 : vector<1x1x4x8xf32> to vector<4x8xf32>
    %104 = vector.shape_cast %101 : vector<4x8xf32> to vector<1x1x4x8xf32>
    tpu.vector_store %arg9[%c5_93, %c2_94, %c0_95, %c0_96], %104 {strides = array<i32>} : memref<8x5x5x8xf32, #tpu.memory_space<vmem>>, vector<1x1x4x8xf32>,
    %105 = vector.extract_strided_slice %10 {offsets = [92, 0], sizes = [4, 8], strides = [1, 1]} : vector<128x8xf32> to vector<4x8xf32>
    %c7_97 = arith.constant 7 : index
    %c2_98 = arith.constant 2 : index
    %c1_99 = arith.constant 1 : index
    %c0_100 = arith.constant 0 : index
    %106 = vector.load %arg9[%c7_97, %c2_98, %c1_99, %c0_100] : memref<8x5x5x8xf32, #tpu.memory_space<vmem>>, vector<1x1x4x8xf32>
    %107 = vector.shape_cast %106 : vector<1x1x4x8xf32> to vector<4x8xf32>
    %108 = vector.shape_cast %105 : vector<4x8xf32> to vector<1x1x4x8xf32>
    tpu.vector_store %arg9[%c7_97, %c2_98, %c1_99, %c0_100], %108 {strides = array<i32>} : memref<8x5x5x8xf32, #tpu.memory_space<vmem>>, vector<1x1x4x8xf32>,
    %109 = vector.extract_strided_slice %10 {offsets = [96, 0], sizes = [4, 8], strides = [1, 1]} : vector<128x8xf32> to vector<4x8xf32>
    %c1_101 = arith.constant 1 : index
    %c2_102 = arith.constant 2 : index
    %c0_103 = arith.constant 0 : index
    %c0_104 = arith.constant 0 : index
    %110 = vector.load %arg9[%c1_101, %c2_102, %c0_103, %c0_104] : memref<8x5x5x8xf32, #tpu.memory_space<vmem>>, vector<1x1x4x8xf32>
    %111 = vector.shape_cast %110 : vector<1x1x4x8xf32> to vector<4x8xf32>
    %112 = vector.shape_cast %109 : vector<4x8xf32> to vector<1x1x4x8xf32>
    tpu.vector_store %arg9[%c1_101, %c2_102, %c0_103, %c0_104], %112 {strides = array<i32>} : memref<8x5x5x8xf32, #tpu.memory_space<vmem>>, vector<1x1x4x8xf32>,
    %113 = vector.extract_strided_slice %10 {offsets = [100, 0], sizes = [4, 8], strides = [1, 1]} : vector<128x8xf32> to vector<4x8xf32>
    %c3_105 = arith.constant 3 : index
    %c2_106 = arith.constant 2 : index
    %c1_107 = arith.constant 1 : index
    %c0_108 = arith.constant 0 : index
    %114 = vector.load %arg9[%c3_105, %c2_106, %c1_107, %c0_108] : memref<8x5x5x8xf32, #tpu.memory_space<vmem>>, vector<1x1x4x8xf32>
    %115 = vector.shape_cast %114 : vector<1x1x4x8xf32> to vector<4x8xf32>
    %116 = vector.shape_cast %113 : vector<4x8xf32> to vector<1x1x4x8xf32>
    tpu.vector_store %arg9[%c3_105, %c2_106, %c1_107, %c0_108], %116 {strides = array<i32>} : memref<8x5x5x8xf32, #tpu.memory_space<vmem>>, vector<1x1x4x8xf32>,
    %117 = vector.extract_strided_slice %10 {offsets = [104, 0], sizes = [4, 8], strides = [1, 1]} : vector<128x8xf32> to vector<4x8xf32>
    %c5_109 = arith.constant 5 : index
    %c3_110 = arith.constant 3 : index
    %c0_111 = arith.constant 0 : index
    %c0_112 = arith.constant 0 : index
    %118 = vector.load %arg9[%c5_109, %c3_110, %c0_111, %c0_112] : memref<8x5x5x8xf32, #tpu.memory_space<vmem>>, vector<1x1x4x8xf32>
    %119 = vector.shape_cast %118 : vector<1x1x4x8xf32> to vector<4x8xf32>
    %120 = vector.shape_cast %117 : vector<4x8xf32> to vector<1x1x4x8xf32>
    tpu.vector_store %arg9[%c5_109, %c3_110, %c0_111, %c0_112], %120 {strides = array<i32>} : memref<8x5x5x8xf32, #tpu.memory_space<vmem>>, vector<1x1x4x8xf32>,
    %121 = vector.extract_strided_slice %10 {offsets = [108, 0], sizes = [4, 8], strides = [1, 1]} : vector<128x8xf32> to vector<4x8xf32>
    %c7_113 = arith.constant 7 : index
    %c3_114 = arith.constant 3 : index
    %c1_115 = arith.constant 1 : index
    %c0_116 = arith.constant 0 : index
    %122 = vector.load %arg9[%c7_113, %c3_114, %c1_115, %c0_116] : memref<8x5x5x8xf32, #tpu.memory_space<vmem>>, vector<1x1x4x8xf32>
    %123 = vector.shape_cast %122 : vector<1x1x4x8xf32> to vector<4x8xf32>
    %124 = vector.shape_cast %121 : vector<4x8xf32> to vector<1x1x4x8xf32>
    tpu.vector_store %arg9[%c7_113, %c3_114, %c1_115, %c0_116], %124 {strides = array<i32>} : memref<8x5x5x8xf32, #tpu.memory_space<vmem>>, vector<1x1x4x8xf32>,
    %125 = vector.extract_strided_slice %10 {offsets = [112, 0], sizes = [4, 8], strides = [1, 1]} : vector<128x8xf32> to vector<4x8xf32>
    %c1_117 = arith.constant 1 : index
    %c3_118 = arith.constant 3 : index
    %c0_119 = arith.constant 0 : index
    %c0_120 = arith.constant 0 : index
    %126 = vector.load %arg9[%c1_117, %c3_118, %c0_119, %c0_120] : memref<8x5x5x8xf32, #tpu.memory_space<vmem>>, vector<1x1x4x8xf32>
    %127 = vector.shape_cast %126 : vector<1x1x4x8xf32> to vector<4x8xf32>
    %128 = vector.shape_cast %125 : vector<4x8xf32> to vector<1x1x4x8xf32>
    tpu.vector_store %arg9[%c1_117, %c3_118, %c0_119, %c0_120], %128 {strides = array<i32>} : memref<8x5x5x8xf32, #tpu.memory_space<vmem>>, vector<1x1x4x8xf32>,
    %129 = vector.extract_strided_slice %10 {offsets = [116, 0], sizes = [4, 8], strides = [1, 1]} : vector<128x8xf32> to vector<4x8xf32>
    %c3_121 = arith.constant 3 : index
    %c3_122 = arith.constant 3 : index
    %c1_123 = arith.constant 1 : index
    %c0_124 = arith.constant 0 : index
    %130 = vector.load %arg9[%c3_121, %c3_122, %c1_123, %c0_124] : memref<8x5x5x8xf32, #tpu.memory_space<vmem>>, vector<1x1x4x8xf32>
    %131 = vector.shape_cast %130 : vector<1x1x4x8xf32> to vector<4x8xf32>
    %132 = vector.shape_cast %129 : vector<4x8xf32> to vector<1x1x4x8xf32>
    tpu.vector_store %arg9[%c3_121, %c3_122, %c1_123, %c0_124], %132 {strides = array<i32>} : memref<8x5x5x8xf32, #tpu.memory_space<vmem>>, vector<1x1x4x8xf32>,
    %133 = vector.extract_strided_slice %10 {offsets = [120, 0], sizes = [4, 8], strides = [1, 1]} : vector<128x8xf32> to vector<4x8xf32>
    %c5_125 = arith.constant 5 : index
    %c4_126 = arith.constant 4 : index
    %c0_127 = arith.constant 0 : index
    %c0_128 = arith.constant 0 : index
    %134 = vector.load %arg9[%c5_125, %c4_126, %c0_127, %c0_128] : memref<8x5x5x8xf32, #tpu.memory_space<vmem>>, vector<1x1x4x8xf32>
    %135 = vector.shape_cast %134 : vector<1x1x4x8xf32> to vector<4x8xf32>
    %136 = vector.shape_cast %133 : vector<4x8xf32> to vector<1x1x4x8xf32>
    tpu.vector_store %arg9[%c5_125, %c4_126, %c0_127, %c0_128], %136 {strides = array<i32>} : memref<8x5x5x8xf32, #tpu.memory_space<vmem>>, vector<1x1x4x8xf32>,
    %137 = vector.extract_strided_slice %10 {offsets = [124, 0], sizes = [4, 8], strides = [1, 1]} : vector<128x8xf32> to vector<4x8xf32>
    %c7_129 = arith.constant 7 : index
    %c4_130 = arith.constant 4 : index
    %c1_131 = arith.constant 1 : index
    %c0_132 = arith.constant 0 : index
    %138 = vector.load %arg9[%c7_129, %c4_130, %c1_131, %c0_132] : memref<8x5x5x8xf32, #tpu.memory_space<vmem>>, vector<1x1x4x8xf32>
    %139 = vector.shape_cast %138 : vector<1x1x4x8xf32> to vector<4x8xf32>
    %140 = vector.shape_cast %137 : vector<4x8xf32> to vector<1x1x4x8xf32>
    tpu.vector_store %arg9[%c7_129, %c4_130, %c1_131, %c0_132], %140 {strides = array<i32>} : memref<8x5x5x8xf32, #tpu.memory_space<vmem>>, vector<1x1x4x8xf32>,
    %c0_133 = arith.constant 0 : index
    %c0_134 = arith.constant 0 : index
    %141 = vector.load %arg4[%c0_133, %c0_134] : memref<72x16xbf16, #tpu.memory_space<vmem>>, vector<72x16xbf16>
    %c0_135 = arith.constant 0 : index
    %c0_136 = arith.constant 0 : index
    %142 = vector.load %arg5[%c0_135, %c0_136] : memref<1x16xf32, #tpu.memory_space<vmem>>, vector<1x16xf32>
    %c6_137 = arith.constant 6 : index
    %c0_138 = arith.constant 0 : index
    %c0_139 = arith.constant 0 : index
    %c0_140 = arith.constant 0 : index
    %143 = vector.load %arg9[%c6_137, %c0_138, %c0_139, %c0_140] : memref<8x5x5x8xf32, #tpu.memory_space<vmem>>, vector<1x1x4x8xf32>
    %144 = vector.shape_cast %143 : vector<1x1x4x8xf32> to vector<4x8xf32>
    %c4_141 = arith.constant 4 : index
    %c0_142 = arith.constant 0 : index
    %c0_143 = arith.constant 0 : index
    %c0_144 = arith.constant 0 : index
    %145 = vector.load %arg9[%c4_141, %c0_142, %c0_143, %c0_144] : memref<8x5x5x8xf32, #tpu.memory_space<vmem>>, vector<1x1x4x8xf32>
    %146 = vector.shape_cast %145 : vector<1x1x4x8xf32> to vector<4x8xf32>
    %c6_145 = arith.constant 6 : index
    %c0_146 = arith.constant 0 : index
    %c1_147 = arith.constant 1 : index
    %c0_148 = arith.constant 0 : index
    %147 = vector.load %arg9[%c6_145, %c0_146, %c1_147, %c0_148] : memref<8x5x5x8xf32, #tpu.memory_space<vmem>>, vector<1x1x4x8xf32>
    %148 = vector.shape_cast %147 : vector<1x1x4x8xf32> to vector<4x8xf32>
    %c2_149 = arith.constant 2 : index
    %c0_150 = arith.constant 0 : index
    %c0_151 = arith.constant 0 : index
    %c0_152 = arith.constant 0 : index
    %149 = vector.load %arg9[%c2_149, %c0_150, %c0_151, %c0_152] : memref<8x5x5x8xf32, #tpu.memory_space<vmem>>, vector<1x1x4x8xf32>
    %150 = vector.shape_cast %149 : vector<1x1x4x8xf32> to vector<4x8xf32>
    %c0_153 = arith.constant 0 : index
    %c0_154 = arith.constant 0 : index
    %c0_155 = arith.constant 0 : index
    %c0_156 = arith.constant 0 : index
    %151 = vector.load %arg9[%c0_153, %c0_154, %c0_155, %c0_156] : memref<8x5x5x8xf32, #tpu.memory_space<vmem>>, vector<1x1x4x8xf32>
    %152 = vector.shape_cast %151 : vector<1x1x4x8xf32> to vector<4x8xf32>
    %c2_157 = arith.constant 2 : index
    %c0_158 = arith.constant 0 : index
    %c1_159 = arith.constant 1 : index
    %c0_160 = arith.constant 0 : index
    %153 = vector.load %arg9[%c2_157, %c0_158, %c1_159, %c0_160] : memref<8x5x5x8xf32, #tpu.memory_space<vmem>>, vector<1x1x4x8xf32>
    %154 = vector.shape_cast %153 : vector<1x1x4x8xf32> to vector<4x8xf32>
    %c6_161 = arith.constant 6 : index
    %c1_162 = arith.constant 1 : index
    %c0_163 = arith.constant 0 : index
    %c0_164 = arith.constant 0 : index
    %155 = vector.load %arg9[%c6_161, %c1_162, %c0_163, %c0_164] : memref<8x5x5x8xf32, #tpu.memory_space<vmem>>, vector<1x1x4x8xf32>
    %156 = vector.shape_cast %155 : vector<1x1x4x8xf32> to vector<4x8xf32>
    %c4_165 = arith.constant 4 : index
    %c1_166 = arith.constant 1 : index
    %c0_167 = arith.constant 0 : index
    %c0_168 = arith.constant 0 : index
    %157 = vector.load %arg9[%c4_165, %c1_166, %c0_167, %c0_168] : memref<8x5x5x8xf32, #tpu.memory_space<vmem>>, vector<1x1x4x8xf32>
    %158 = vector.shape_cast %157 : vector<1x1x4x8xf32> to vector<4x8xf32>
    %c6_169 = arith.constant 6 : index
    %c1_170 = arith.constant 1 : index
    %c1_171 = arith.constant 1 : index
    %c0_172 = arith.constant 0 : index
    %159 = vector.load %arg9[%c6_169, %c1_170, %c1_171, %c0_172] : memref<8x5x5x8xf32, #tpu.memory_space<vmem>>, vector<1x1x4x8xf32>
    %160 = vector.shape_cast %159 : vector<1x1x4x8xf32> to vector<4x8xf32>
    %161 = tpu.concatenate %144, %146, %148, %150, %152, %154, %156, %158, %160 in 1 : vector<4x8xf32>, vector<4x8xf32>, vector<4x8xf32>, vector<4x8xf32>, vector<4x8xf32>, vector<4x8xf32>, vector<4x8xf32>, vector<4x8xf32>, vector<4x8xf32> -> vector<4x72xf32>
    %c6_173 = arith.constant 6 : index
    %c1_174 = arith.constant 1 : index
    %c0_175 = arith.constant 0 : index
    %c0_176 = arith.constant 0 : index
    %162 = vector.load %arg9[%c6_173, %c1_174, %c0_175, %c0_176] : memref<8x5x5x8xf32, #tpu.memory_space<vmem>>, vector<1x1x4x8xf32>
    %163 = vector.shape_cast %162 : vector<1x1x4x8xf32> to vector<4x8xf32>
    %c4_177 = arith.constant 4 : index
    %c1_178 = arith.constant 1 : index
    %c0_179 = arith.constant 0 : index
    %c0_180 = arith.constant 0 : index
    %164 = vector.load %arg9[%c4_177, %c1_178, %c0_179, %c0_180] : memref<8x5x5x8xf32, #tpu.memory_space<vmem>>, vector<1x1x4x8xf32>
    %165 = vector.shape_cast %164 : vector<1x1x4x8xf32> to vector<4x8xf32>
    %c6_181 = arith.constant 6 : index
    %c1_182 = arith.constant 1 : index
    %c1_183 = arith.constant 1 : index
    %c0_184 = arith.constant 0 : index
    %166 = vector.load %arg9[%c6_181, %c1_182, %c1_183, %c0_184] : memref<8x5x5x8xf32, #tpu.memory_space<vmem>>, vector<1x1x4x8xf32>
    %167 = vector.shape_cast %166 : vector<1x1x4x8xf32> to vector<4x8xf32>
    %c2_185 = arith.constant 2 : index
    %c1_186 = arith.constant 1 : index
    %c0_187 = arith.constant 0 : index
    %c0_188 = arith.constant 0 : index
    %168 = vector.load %arg9[%c2_185, %c1_186, %c0_187, %c0_188] : memref<8x5x5x8xf32, #tpu.memory_space<vmem>>, vector<1x1x4x8xf32>
    %169 = vector.shape_cast %168 : vector<1x1x4x8xf32> to vector<4x8xf32>
    %c0_189 = arith.constant 0 : index
    %c1_190 = arith.constant 1 : index
    %c0_191 = arith.constant 0 : index
    %c0_192 = arith.constant 0 : index
    %170 = vector.load %arg9[%c0_189, %c1_190, %c0_191, %c0_192] : memref<8x5x5x8xf32, #tpu.memory_space<vmem>>, vector<1x1x4x8xf32>
    %171 = vector.shape_cast %170 : vector<1x1x4x8xf32> to vector<4x8xf32>
    %c2_193 = arith.constant 2 : index
    %c1_194 = arith.constant 1 : index
    %c1_195 = arith.constant 1 : index
    %c0_196 = arith.constant 0 : index
    %172 = vector.load %arg9[%c2_193, %c1_194, %c1_195, %c0_196] : memref<8x5x5x8xf32, #tpu.memory_space<vmem>>, vector<1x1x4x8xf32>
    %173 = vector.shape_cast %172 : vector<1x1x4x8xf32> to vector<4x8xf32>
    %c6_197 = arith.constant 6 : index
    %c2_198 = arith.constant 2 : index
    %c0_199 = arith.constant 0 : index
    %c0_200 = arith.constant 0 : index
    %174 = vector.load %arg9[%c6_197, %c2_198, %c0_199, %c0_200] : memref<8x5x5x8xf32, #tpu.memory_space<vmem>>, vector<1x1x4x8xf32>
    %175 = vector.shape_cast %174 : vector<1x1x4x8xf32> to vector<4x8xf32>
    %c4_201 = arith.constant 4 : index
    %c2_202 = arith.constant 2 : index
    %c0_203 = arith.constant 0 : index
    %c0_204 = arith.constant 0 : index
    %176 = vector.load %arg9[%c4_201, %c2_202, %c0_203, %c0_204] : memref<8x5x5x8xf32, #tpu.memory_space<vmem>>, vector<1x1x4x8xf32>
    %177 = vector.shape_cast %176 : vector<1x1x4x8xf32> to vector<4x8xf32>
    %c6_205 = arith.constant 6 : index
    %c2_206 = arith.constant 2 : index
    %c1_207 = arith.constant 1 : index
    %c0_208 = arith.constant 0 : index
    %178 = vector.load %arg9[%c6_205, %c2_206, %c1_207, %c0_208] : memref<8x5x5x8xf32, #tpu.memory_space<vmem>>, vector<1x1x4x8xf32>
    %179 = vector.shape_cast %178 : vector<1x1x4x8xf32> to vector<4x8xf32>
    %180 = tpu.concatenate %163, %165, %167, %169, %171, %173, %175, %177, %179 in 1 : vector<4x8xf32>, vector<4x8xf32>, vector<4x8xf32>, vector<4x8xf32>, vector<4x8xf32>, vector<4x8xf32>, vector<4x8xf32>, vector<4x8xf32>, vector<4x8xf32> -> vector<4x72xf32>
    %c6_209 = arith.constant 6 : index
    %c2_210 = arith.constant 2 : index
    %c0_211 = arith.constant 0 : index
    %c0_212 = arith.constant 0 : index
    %181 = vector.load %arg9[%c6_209, %c2_210, %c0_211, %c0_212] : memref<8x5x5x8xf32, #tpu.memory_space<vmem>>, vector<1x1x4x8xf32>
    %182 = vector.shape_cast %181 : vector<1x1x4x8xf32> to vector<4x8xf32>
    %c4_213 = arith.constant 4 : index
    %c2_214 = arith.constant 2 : index
    %c0_215 = arith.constant 0 : index
    %c0_216 = arith.constant 0 : index
    %183 = vector.load %arg9[%c4_213, %c2_214, %c0_215, %c0_216] : memref<8x5x5x8xf32, #tpu.memory_space<vmem>>, vector<1x1x4x8xf32>
    %184 = vector.shape_cast %183 : vector<1x1x4x8xf32> to vector<4x8xf32>
    %c6_217 = arith.constant 6 : index
    %c2_218 = arith.constant 2 : index
    %c1_219 = arith.constant 1 : index
    %c0_220 = arith.constant 0 : index
    %185 = vector.load %arg9[%c6_217, %c2_218, %c1_219, %c0_220] : memref<8x5x5x8xf32, #tpu.memory_space<vmem>>, vector<1x1x4x8xf32>
    %186 = vector.shape_cast %185 : vector<1x1x4x8xf32> to vector<4x8xf32>
    %c2_221 = arith.constant 2 : index
    %c2_222 = arith.constant 2 : index
    %c0_223 = arith.constant 0 : index
    %c0_224 = arith.constant 0 : index
    %187 = vector.load %arg9[%c2_221, %c2_222, %c0_223, %c0_224] : memref<8x5x5x8xf32, #tpu.memory_space<vmem>>, vector<1x1x4x8xf32>
    %188 = vector.shape_cast %187 : vector<1x1x4x8xf32> to vector<4x8xf32>
    %c0_225 = arith.constant 0 : index
    %c2_226 = arith.constant 2 : index
    %c0_227 = arith.constant 0 : index
    %c0_228 = arith.constant 0 : index
    %189 = vector.load %arg9[%c0_225, %c2_226, %c0_227, %c0_228] : memref<8x5x5x8xf32, #tpu.memory_space<vmem>>, vector<1x1x4x8xf32>
    %190 = vector.shape_cast %189 : vector<1x1x4x8xf32> to vector<4x8xf32>
    %c2_229 = arith.constant 2 : index
    %c2_230 = arith.constant 2 : index
    %c1_231 = arith.constant 1 : index
    %c0_232 = arith.constant 0 : index
    %191 = vector.load %arg9[%c2_229, %c2_230, %c1_231, %c0_232] : memref<8x5x5x8xf32, #tpu.memory_space<vmem>>, vector<1x1x4x8xf32>
    %192 = vector.shape_cast %191 : vector<1x1x4x8xf32> to vector<4x8xf32>
    %c6_233 = arith.constant 6 : index
    %c3_234 = arith.constant 3 : index
    %c0_235 = arith.constant 0 : index
    %c0_236 = arith.constant 0 : index
    %193 = vector.load %arg9[%c6_233, %c3_234, %c0_235, %c0_236] : memref<8x5x5x8xf32, #tpu.memory_space<vmem>>, vector<1x1x4x8xf32>
    %194 = vector.shape_cast %193 : vector<1x1x4x8xf32> to vector<4x8xf32>
    %c4_237 = arith.constant 4 : index
    %c3_238 = arith.constant 3 : index
    %c0_239 = arith.constant 0 : index
    %c0_240 = arith.constant 0 : index
    %195 = vector.load %arg9[%c4_237, %c3_238, %c0_239, %c0_240] : memref<8x5x5x8xf32, #tpu.memory_space<vmem>>, vector<1x1x4x8xf32>
    %196 = vector.shape_cast %195 : vector<1x1x4x8xf32> to vector<4x8xf32>
    %c6_241 = arith.constant 6 : index
    %c3_242 = arith.constant 3 : index
    %c1_243 = arith.constant 1 : index
    %c0_244 = arith.constant 0 : index
    %197 = vector.load %arg9[%c6_241, %c3_242, %c1_243, %c0_244] : memref<8x5x5x8xf32, #tpu.memory_space<vmem>>, vector<1x1x4x8xf32>
    %198 = vector.shape_cast %197 : vector<1x1x4x8xf32> to vector<4x8xf32>
    %199 = tpu.concatenate %182, %184, %186, %188, %190, %192, %194, %196, %198 in 1 : vector<4x8xf32>, vector<4x8xf32>, vector<4x8xf32>, vector<4x8xf32>, vector<4x8xf32>, vector<4x8xf32>, vector<4x8xf32>, vector<4x8xf32>, vector<4x8xf32> -> vector<4x72xf32>
    %c6_245 = arith.constant 6 : index
    %c3_246 = arith.constant 3 : index
    %c0_247 = arith.constant 0 : index
    %c0_248 = arith.constant 0 : index
    %200 = vector.load %arg9[%c6_245, %c3_246, %c0_247, %c0_248] : memref<8x5x5x8xf32, #tpu.memory_space<vmem>>, vector<1x1x4x8xf32>
    %201 = vector.shape_cast %200 : vector<1x1x4x8xf32> to vector<4x8xf32>
    %c4_249 = arith.constant 4 : index
    %c3_250 = arith.constant 3 : index
    %c0_251 = arith.constant 0 : index
    %c0_252 = arith.constant 0 : index
    %202 = vector.load %arg9[%c4_249, %c3_250, %c0_251, %c0_252] : memref<8x5x5x8xf32, #tpu.memory_space<vmem>>, vector<1x1x4x8xf32>
    %203 = vector.shape_cast %202 : vector<1x1x4x8xf32> to vector<4x8xf32>
    %c6_253 = arith.constant 6 : index
    %c3_254 = arith.constant 3 : index
    %c1_255 = arith.constant 1 : index
    %c0_256 = arith.constant 0 : index
    %204 = vector.load %arg9[%c6_253, %c3_254, %c1_255, %c0_256] : memref<8x5x5x8xf32, #tpu.memory_space<vmem>>, vector<1x1x4x8xf32>
    %205 = vector.shape_cast %204 : vector<1x1x4x8xf32> to vector<4x8xf32>
    %c2_257 = arith.constant 2 : index
    %c3_258 = arith.constant 3 : index
    %c0_259 = arith.constant 0 : index
    %c0_260 = arith.constant 0 : index
    %206 = vector.load %arg9[%c2_257, %c3_258, %c0_259, %c0_260] : memref<8x5x5x8xf32, #tpu.memory_space<vmem>>, vector<1x1x4x8xf32>
    %207 = vector.shape_cast %206 : vector<1x1x4x8xf32> to vector<4x8xf32>
    %c0_261 = arith.constant 0 : index
    %c3_262 = arith.constant 3 : index
    %c0_263 = arith.constant 0 : index
    %c0_264 = arith.constant 0 : index
    %208 = vector.load %arg9[%c0_261, %c3_262, %c0_263, %c0_264] : memref<8x5x5x8xf32, #tpu.memory_space<vmem>>, vector<1x1x4x8xf32>
    %209 = vector.shape_cast %208 : vector<1x1x4x8xf32> to vector<4x8xf32>
    %c2_265 = arith.constant 2 : index
    %c3_266 = arith.constant 3 : index
    %c1_267 = arith.constant 1 : index
    %c0_268 = arith.constant 0 : index
    %210 = vector.load %arg9[%c2_265, %c3_266, %c1_267, %c0_268] : memref<8x5x5x8xf32, #tpu.memory_space<vmem>>, vector<1x1x4x8xf32>
    %211 = vector.shape_cast %210 : vector<1x1x4x8xf32> to vector<4x8xf32>
    %c6_269 = arith.constant 6 : index
    %c4_270 = arith.constant 4 : index
    %c0_271 = arith.constant 0 : index
    %c0_272 = arith.constant 0 : index
    %212 = vector.load %arg9[%c6_269, %c4_270, %c0_271, %c0_272] : memref<8x5x5x8xf32, #tpu.memory_space<vmem>>, vector<1x1x4x8xf32>
    %213 = vector.shape_cast %212 : vector<1x1x4x8xf32> to vector<4x8xf32>
    %c4_273 = arith.constant 4 : index
    %c4_274 = arith.constant 4 : index
    %c0_275 = arith.constant 0 : index
    %c0_276 = arith.constant 0 : index
    %214 = vector.load %arg9[%c4_273, %c4_274, %c0_275, %c0_276] : memref<8x5x5x8xf32, #tpu.memory_space<vmem>>, vector<1x1x4x8xf32>
    %215 = vector.shape_cast %214 : vector<1x1x4x8xf32> to vector<4x8xf32>
    %c6_277 = arith.constant 6 : index
    %c4_278 = arith.constant 4 : index
    %c1_279 = arith.constant 1 : index
    %c0_280 = arith.constant 0 : index
    %216 = vector.load %arg9[%c6_277, %c4_278, %c1_279, %c0_280] : memref<8x5x5x8xf32, #tpu.memory_space<vmem>>, vector<1x1x4x8xf32>
    %217 = vector.shape_cast %216 : vector<1x1x4x8xf32> to vector<4x8xf32>
    %218 = tpu.concatenate %201, %203, %205, %207, %209, %211, %213, %215, %217 in 1 : vector<4x8xf32>, vector<4x8xf32>, vector<4x8xf32>, vector<4x8xf32>, vector<4x8xf32>, vector<4x8xf32>, vector<4x8xf32>, vector<4x8xf32>, vector<4x8xf32> -> vector<4x72xf32>
    %c7_281 = arith.constant 7 : index
    %c0_282 = arith.constant 0 : index
    %c0_283 = arith.constant 0 : index
    %c0_284 = arith.constant 0 : index
    %219 = vector.load %arg9[%c7_281, %c0_282, %c0_283, %c0_284] : memref<8x5x5x8xf32, #tpu.memory_space<vmem>>, vector<1x1x4x8xf32>
    %220 = vector.shape_cast %219 : vector<1x1x4x8xf32> to vector<4x8xf32>
    %c5_285 = arith.constant 5 : index
    %c0_286 = arith.constant 0 : index
    %c0_287 = arith.constant 0 : index
    %c0_288 = arith.constant 0 : index
    %221 = vector.load %arg9[%c5_285, %c0_286, %c0_287, %c0_288] : memref<8x5x5x8xf32, #tpu.memory_space<vmem>>, vector<1x1x4x8xf32>
    %222 = vector.shape_cast %221 : vector<1x1x4x8xf32> to vector<4x8xf32>
    %c7_289 = arith.constant 7 : index
    %c0_290 = arith.constant 0 : index
    %c1_291 = arith.constant 1 : index
    %c0_292 = arith.constant 0 : index
    %223 = vector.load %arg9[%c7_289, %c0_290, %c1_291, %c0_292] : memref<8x5x5x8xf32, #tpu.memory_space<vmem>>, vector<1x1x4x8xf32>
    %224 = vector.shape_cast %223 : vector<1x1x4x8xf32> to vector<4x8xf32>
    %c3_293 = arith.constant 3 : index
    %c0_294 = arith.constant 0 : index
    %c0_295 = arith.constant 0 : index
    %c0_296 = arith.constant 0 : index
    %225 = vector.load %arg9[%c3_293, %c0_294, %c0_295, %c0_296] : memref<8x5x5x8xf32, #tpu.memory_space<vmem>>, vector<1x1x4x8xf32>
    %226 = vector.shape_cast %225 : vector<1x1x4x8xf32> to vector<4x8xf32>
    %c1_297 = arith.constant 1 : index
    %c0_298 = arith.constant 0 : index
    %c0_299 = arith.constant 0 : index
    %c0_300 = arith.constant 0 : index
    %227 = vector.load %arg9[%c1_297, %c0_298, %c0_299, %c0_300] : memref<8x5x5x8xf32, #tpu.memory_space<vmem>>, vector<1x1x4x8xf32>
    %228 = vector.shape_cast %227 : vector<1x1x4x8xf32> to vector<4x8xf32>
    %c3_301 = arith.constant 3 : index
    %c0_302 = arith.constant 0 : index
    %c1_303 = arith.constant 1 : index
    %c0_304 = arith.constant 0 : index
    %229 = vector.load %arg9[%c3_301, %c0_302, %c1_303, %c0_304] : memref<8x5x5x8xf32, #tpu.memory_space<vmem>>, vector<1x1x4x8xf32>
    %230 = vector.shape_cast %229 : vector<1x1x4x8xf32> to vector<4x8xf32>
    %c7_305 = arith.constant 7 : index
    %c1_306 = arith.constant 1 : index
    %c0_307 = arith.constant 0 : index
    %c0_308 = arith.constant 0 : index
    %231 = vector.load %arg9[%c7_305, %c1_306, %c0_307, %c0_308] : memref<8x5x5x8xf32, #tpu.memory_space<vmem>>, vector<1x1x4x8xf32>
    %232 = vector.shape_cast %231 : vector<1x1x4x8xf32> to vector<4x8xf32>
    %c5_309 = arith.constant 5 : index
    %c1_310 = arith.constant 1 : index
    %c0_311 = arith.constant 0 : index
    %c0_312 = arith.constant 0 : index
    %233 = vector.load %arg9[%c5_309, %c1_310, %c0_311, %c0_312] : memref<8x5x5x8xf32, #tpu.memory_space<vmem>>, vector<1x1x4x8xf32>
    %234 = vector.shape_cast %233 : vector<1x1x4x8xf32> to vector<4x8xf32>
    %c7_313 = arith.constant 7 : index
    %c1_314 = arith.constant 1 : index
    %c1_315 = arith.constant 1 : index
    %c0_316 = arith.constant 0 : index
    %235 = vector.load %arg9[%c7_313, %c1_314, %c1_315, %c0_316] : memref<8x5x5x8xf32, #tpu.memory_space<vmem>>, vector<1x1x4x8xf32>
    %236 = vector.shape_cast %235 : vector<1x1x4x8xf32> to vector<4x8xf32>
    %237 = tpu.concatenate %220, %222, %224, %226, %228, %230, %232, %234, %236 in 1 : vector<4x8xf32>, vector<4x8xf32>, vector<4x8xf32>, vector<4x8xf32>, vector<4x8xf32>, vector<4x8xf32>, vector<4x8xf32>, vector<4x8xf32>, vector<4x8xf32> -> vector<4x72xf32>
    %c7_317 = arith.constant 7 : index
    %c1_318 = arith.constant 1 : index
    %c0_319 = arith.constant 0 : index
    %c0_320 = arith.constant 0 : index
    %238 = vector.load %arg9[%c7_317, %c1_318, %c0_319, %c0_320] : memref<8x5x5x8xf32, #tpu.memory_space<vmem>>, vector<1x1x4x8xf32>
    %239 = vector.shape_cast %238 : vector<1x1x4x8xf32> to vector<4x8xf32>
    %c5_321 = arith.constant 5 : index
    %c1_322 = arith.constant 1 : index
    %c0_323 = arith.constant 0 : index
    %c0_324 = arith.constant 0 : index
    %240 = vector.load %arg9[%c5_321, %c1_322, %c0_323, %c0_324] : memref<8x5x5x8xf32, #tpu.memory_space<vmem>>, vector<1x1x4x8xf32>
    %241 = vector.shape_cast %240 : vector<1x1x4x8xf32> to vector<4x8xf32>
    %c7_325 = arith.constant 7 : index
    %c1_326 = arith.constant 1 : index
    %c1_327 = arith.constant 1 : index
    %c0_328 = arith.constant 0 : index
    %242 = vector.load %arg9[%c7_325, %c1_326, %c1_327, %c0_328] : memref<8x5x5x8xf32, #tpu.memory_space<vmem>>, vector<1x1x4x8xf32>
    %243 = vector.shape_cast %242 : vector<1x1x4x8xf32> to vector<4x8xf32>
    %c3_329 = arith.constant 3 : index
    %c1_330 = arith.constant 1 : index
    %c0_331 = arith.constant 0 : index
    %c0_332 = arith.constant 0 : index
    %244 = vector.load %arg9[%c3_329, %c1_330, %c0_331, %c0_332] : memref<8x5x5x8xf32, #tpu.memory_space<vmem>>, vector<1x1x4x8xf32>
    %245 = vector.shape_cast %244 : vector<1x1x4x8xf32> to vector<4x8xf32>
    %c1_333 = arith.constant 1 : index
    %c1_334 = arith.constant 1 : index
    %c0_335 = arith.constant 0 : index
    %c0_336 = arith.constant 0 : index
    %246 = vector.load %arg9[%c1_333, %c1_334, %c0_335, %c0_336] : memref<8x5x5x8xf32, #tpu.memory_space<vmem>>, vector<1x1x4x8xf32>
    %247 = vector.shape_cast %246 : vector<1x1x4x8xf32> to vector<4x8xf32>
    %c3_337 = arith.constant 3 : index
    %c1_338 = arith.constant 1 : index
    %c1_339 = arith.constant 1 : index
    %c0_340 = arith.constant 0 : index
    %248 = vector.load %arg9[%c3_337, %c1_338, %c1_339, %c0_340] : memref<8x5x5x8xf32, #tpu.memory_space<vmem>>, vector<1x1x4x8xf32>
    %249 = vector.shape_cast %248 : vector<1x1x4x8xf32> to vector<4x8xf32>
    %c7_341 = arith.constant 7 : index
    %c2_342 = arith.constant 2 : index
    %c0_343 = arith.constant 0 : index
    %c0_344 = arith.constant 0 : index
    %250 = vector.load %arg9[%c7_341, %c2_342, %c0_343, %c0_344] : memref<8x5x5x8xf32, #tpu.memory_space<vmem>>, vector<1x1x4x8xf32>
    %251 = vector.shape_cast %250 : vector<1x1x4x8xf32> to vector<4x8xf32>
    %c5_345 = arith.constant 5 : index
    %c2_346 = arith.constant 2 : index
    %c0_347 = arith.constant 0 : index
    %c0_348 = arith.constant 0 : index
    %252 = vector.load %arg9[%c5_345, %c2_346, %c0_347, %c0_348] : memref<8x5x5x8xf32, #tpu.memory_space<vmem>>, vector<1x1x4x8xf32>
    %253 = vector.shape_cast %252 : vector<1x1x4x8xf32> to vector<4x8xf32>
    %c7_349 = arith.constant 7 : index
    %c2_350 = arith.constant 2 : index
    %c1_351 = arith.constant 1 : index
    %c0_352 = arith.constant 0 : index
    %254 = vector.load %arg9[%c7_349, %c2_350, %c1_351, %c0_352] : memref<8x5x5x8xf32, #tpu.memory_space<vmem>>, vector<1x1x4x8xf32>
    %255 = vector.shape_cast %254 : vector<1x1x4x8xf32> to vector<4x8xf32>
    %256 = tpu.concatenate %239, %241, %243, %245, %247, %249, %251, %253, %255 in 1 : vector<4x8xf32>, vector<4x8xf32>, vector<4x8xf32>, vector<4x8xf32>, vector<4x8xf32>, vector<4x8xf32>, vector<4x8xf32>, vector<4x8xf32>, vector<4x8xf32> -> vector<4x72xf32>
    %c7_353 = arith.constant 7 : index
    %c2_354 = arith.constant 2 : index
    %c0_355 = arith.constant 0 : index
    %c0_356 = arith.constant 0 : index
    %257 = vector.load %arg9[%c7_353, %c2_354, %c0_355, %c0_356] : memref<8x5x5x8xf32, #tpu.memory_space<vmem>>, vector<1x1x4x8xf32>
    %258 = vector.shape_cast %257 : vector<1x1x4x8xf32> to vector<4x8xf32>
    %c5_357 = arith.constant 5 : index
    %c2_358 = arith.constant 2 : index
    %c0_359 = arith.constant 0 : index
    %c0_360 = arith.constant 0 : index
    %259 = vector.load %arg9[%c5_357, %c2_358, %c0_359, %c0_360] : memref<8x5x5x8xf32, #tpu.memory_space<vmem>>, vector<1x1x4x8xf32>
    %260 = vector.shape_cast %259 : vector<1x1x4x8xf32> to vector<4x8xf32>
    %c7_361 = arith.constant 7 : index
    %c2_362 = arith.constant 2 : index
    %c1_363 = arith.constant 1 : index
    %c0_364 = arith.constant 0 : index
    %261 = vector.load %arg9[%c7_361, %c2_362, %c1_363, %c0_364] : memref<8x5x5x8xf32, #tpu.memory_space<vmem>>, vector<1x1x4x8xf32>
    %262 = vector.shape_cast %261 : vector<1x1x4x8xf32> to vector<4x8xf32>
    %c3_365 = arith.constant 3 : index
    %c2_366 = arith.constant 2 : index
    %c0_367 = arith.constant 0 : index
    %c0_368 = arith.constant 0 : index
    %263 = vector.load %arg9[%c3_365, %c2_366, %c0_367, %c0_368] : memref<8x5x5x8xf32, #tpu.memory_space<vmem>>, vector<1x1x4x8xf32>
    %264 = vector.shape_cast %263 : vector<1x1x4x8xf32> to vector<4x8xf32>
    %c1_369 = arith.constant 1 : index
    %c2_370 = arith.constant 2 : index
    %c0_371 = arith.constant 0 : index
    %c0_372 = arith.constant 0 : index
    %265 = vector.load %arg9[%c1_369, %c2_370, %c0_371, %c0_372] : memref<8x5x5x8xf32, #tpu.memory_space<vmem>>, vector<1x1x4x8xf32>
    %266 = vector.shape_cast %265 : vector<1x1x4x8xf32> to vector<4x8xf32>
    %c3_373 = arith.constant 3 : index
    %c2_374 = arith.constant 2 : index
    %c1_375 = arith.constant 1 : index
    %c0_376 = arith.constant 0 : index
    %267 = vector.load %arg9[%c3_373, %c2_374, %c1_375, %c0_376] : memref<8x5x5x8xf32, #tpu.memory_space<vmem>>, vector<1x1x4x8xf32>
    %268 = vector.shape_cast %267 : vector<1x1x4x8xf32> to vector<4x8xf32>
    %c7_377 = arith.constant 7 : index
    %c3_378 = arith.constant 3 : index
    %c0_379 = arith.constant 0 : index
    %c0_380 = arith.constant 0 : index
    %269 = vector.load %arg9[%c7_377, %c3_378, %c0_379, %c0_380] : memref<8x5x5x8xf32, #tpu.memory_space<vmem>>, vector<1x1x4x8xf32>
    %270 = vector.shape_cast %269 : vector<1x1x4x8xf32> to vector<4x8xf32>
    %c5_381 = arith.constant 5 : index
    %c3_382 = arith.constant 3 : index
    %c0_383 = arith.constant 0 : index
    %c0_384 = arith.constant 0 : index
    %271 = vector.load %arg9[%c5_381, %c3_382, %c0_383, %c0_384] : memref<8x5x5x8xf32, #tpu.memory_space<vmem>>, vector<1x1x4x8xf32>
    %272 = vector.shape_cast %271 : vector<1x1x4x8xf32> to vector<4x8xf32>
    %c7_385 = arith.constant 7 : index
    %c3_386 = arith.constant 3 : index
    %c1_387 = arith.constant 1 : index
    %c0_388 = arith.constant 0 : index
    %273 = vector.load %arg9[%c7_385, %c3_386, %c1_387, %c0_388] : memref<8x5x5x8xf32, #tpu.memory_space<vmem>>, vector<1x1x4x8xf32>
    %274 = vector.shape_cast %273 : vector<1x1x4x8xf32> to vector<4x8xf32>
    %275 = tpu.concatenate %258, %260, %262, %264, %266, %268, %270, %272, %274 in 1 : vector<4x8xf32>, vector<4x8xf32>, vector<4x8xf32>, vector<4x8xf32>, vector<4x8xf32>, vector<4x8xf32>, vector<4x8xf32>, vector<4x8xf32>, vector<4x8xf32> -> vector<4x72xf32>
    %c7_389 = arith.constant 7 : index
    %c3_390 = arith.constant 3 : index
    %c0_391 = arith.constant 0 : index
    %c0_392 = arith.constant 0 : index
    %276 = vector.load %arg9[%c7_389, %c3_390, %c0_391, %c0_392] : memref<8x5x5x8xf32, #tpu.memory_space<vmem>>, vector<1x1x4x8xf32>
    %277 = vector.shape_cast %276 : vector<1x1x4x8xf32> to vector<4x8xf32>
    %c5_393 = arith.constant 5 : index
    %c3_394 = arith.constant 3 : index
    %c0_395 = arith.constant 0 : index
    %c0_396 = arith.constant 0 : index
    %278 = vector.load %arg9[%c5_393, %c3_394, %c0_395, %c0_396] : memref<8x5x5x8xf32, #tpu.memory_space<vmem>>, vector<1x1x4x8xf32>
    %279 = vector.shape_cast %278 : vector<1x1x4x8xf32> to vector<4x8xf32>
    %c7_397 = arith.constant 7 : index
    %c3_398 = arith.constant 3 : index
    %c1_399 = arith.constant 1 : index
    %c0_400 = arith.constant 0 : index
    %280 = vector.load %arg9[%c7_397, %c3_398, %c1_399, %c0_400] : memref<8x5x5x8xf32, #tpu.memory_space<vmem>>, vector<1x1x4x8xf32>
    %281 = vector.shape_cast %280 : vector<1x1x4x8xf32> to vector<4x8xf32>
    %c3_401 = arith.constant 3 : index
    %c3_402 = arith.constant 3 : index
    %c0_403 = arith.constant 0 : index
    %c0_404 = arith.constant 0 : index
    %282 = vector.load %arg9[%c3_401, %c3_402, %c0_403, %c0_404] : memref<8x5x5x8xf32, #tpu.memory_space<vmem>>, vector<1x1x4x8xf32>
    %283 = vector.shape_cast %282 : vector<1x1x4x8xf32> to vector<4x8xf32>
    %c1_405 = arith.constant 1 : index
    %c3_406 = arith.constant 3 : index
    %c0_407 = arith.constant 0 : index
    %c0_408 = arith.constant 0 : index
    %284 = vector.load %arg9[%c1_405, %c3_406, %c0_407, %c0_408] : memref<8x5x5x8xf32, #tpu.memory_space<vmem>>, vector<1x1x4x8xf32>
    %285 = vector.shape_cast %284 : vector<1x1x4x8xf32> to vector<4x8xf32>
    %c3_409 = arith.constant 3 : index
    %c3_410 = arith.constant 3 : index
    %c1_411 = arith.constant 1 : index
    %c0_412 = arith.constant 0 : index
    %286 = vector.load %arg9[%c3_409, %c3_410, %c1_411, %c0_412] : memref<8x5x5x8xf32, #tpu.memory_space<vmem>>, vector<1x1x4x8xf32>
    %287 = vector.shape_cast %286 : vector<1x1x4x8xf32> to vector<4x8xf32>
    %c7_413 = arith.constant 7 : index
    %c4_414 = arith.constant 4 : index
    %c0_415 = arith.constant 0 : index
    %c0_416 = arith.constant 0 : index
    %288 = vector.load %arg9[%c7_413, %c4_414, %c0_415, %c0_416] : memref<8x5x5x8xf32, #tpu.memory_space<vmem>>, vector<1x1x4x8xf32>
    %289 = vector.shape_cast %288 : vector<1x1x4x8xf32> to vector<4x8xf32>
    %c5_417 = arith.constant 5 : index
    %c4_418 = arith.constant 4 : index
    %c0_419 = arith.constant 0 : index
    %c0_420 = arith.constant 0 : index
    %290 = vector.load %arg9[%c5_417, %c4_418, %c0_419, %c0_420] : memref<8x5x5x8xf32, #tpu.memory_space<vmem>>, vector<1x1x4x8xf32>
    %291 = vector.shape_cast %290 : vector<1x1x4x8xf32> to vector<4x8xf32>
    %c7_421 = arith.constant 7 : index
    %c4_422 = arith.constant 4 : index
    %c1_423 = arith.constant 1 : index
    %c0_424 = arith.constant 0 : index
    %292 = vector.load %arg9[%c7_421, %c4_422, %c1_423, %c0_424] : memref<8x5x5x8xf32, #tpu.memory_space<vmem>>, vector<1x1x4x8xf32>
    %293 = vector.shape_cast %292 : vector<1x1x4x8xf32> to vector<4x8xf32>
    %294 = tpu.concatenate %277, %279, %281, %283, %285, %287, %289, %291, %293 in 1 : vector<4x8xf32>, vector<4x8xf32>, vector<4x8xf32>, vector<4x8xf32>, vector<4x8xf32>, vector<4x8xf32>, vector<4x8xf32>, vector<4x8xf32>, vector<4x8xf32> -> vector<4x72xf32>
    %295 = tpu.concatenate %161, %180, %199, %218, %237, %256, %275, %294 in 0 : vector<4x72xf32>, vector<4x72xf32>, vector<4x72xf32>, vector<4x72xf32>, vector<4x72xf32>, vector<4x72xf32>, vector<4x72xf32>, vector<4x72xf32> -> vector<32x72xf32>
    %296 = arith.truncf %295 : vector<32x72xf32> to vector<32x72xbf16>
    %cst_425 = arith.constant dense<0.000000e+00> : vector<32x16xf32>
    %297 = tpu.matmul %296, %141, %cst_425 {dimension_numbers = #tpu.dot_dimension_numbers<[1], [0], [0], [1], [0, 0, 1, 1], [], []>} : vector<32x72xbf16>, vector<72x16xbf16>, vector<32x16xf32> -> vector<32x16xf32>
    %298 = vector.broadcast %142 : vector<1x16xf32> to vector<32x16xf32>
    %299 = arith.addf %297, %298 : vector<32x16xf32>
    %cst_426 = arith.constant 0.000000e+00 : f32
    %300 = vector.broadcast %cst_426 : f32 to vector<32x16xf32>
    %301 = arith.cmpf oge, %299, %300 : vector<32x16xf32>
    %cst_427 = arith.constant 2.000000e-01 : f32
    %302 = vector.broadcast %cst_427 : f32 to vector<32x16xf32>
    %303 = arith.mulf %302, %299 : vector<32x16xf32>
    %304 = arith.select %301, %299, %303 : vector<32x16xi1>, vector<32x16xf32>
    %c0_428 = arith.constant 0 : index
    %c0_429 = arith.constant 0 : index
    %305 = vector.load %arg6[%c0_428, %c0_429] : memref<16x16xf32, #tpu.memory_space<vmem>>, vector<16x16xf32>
    %c0_430 = arith.constant 0 : index
    %c0_431 = arith.constant 0 : index
    %306 = vector.load %arg7[%c0_430, %c0_431] : memref<1x1xf32, #tpu.memory_space<vmem>>, vector<1x1xf32>
    %307 = vector.extract_strided_slice %304 {offsets = [0, 0], sizes = [16, 16], strides = [1, 1]} : vector<32x16xf32> to vector<16x16xf32>
    %308 = arith.mulf %307, %305 : vector<16x16xf32>
    %cst_432 = arith.constant dense<0.000000e+00> : vector<16xf32>
    %309 = vector.multi_reduction <add>, %308, %cst_432 [0] : vector<16x16xf32> to vector<16xf32>
    %310 = vector.shape_cast %309 : vector<16xf32> to vector<1x16xf32>
    %cst_433 = arith.constant dense<0.000000e+00> : vector<1xf32>
    %311 = vector.multi_reduction <add>, %310, %cst_433 [1] : vector<1x16xf32> to vector<1xf32>
    %312 = vector.shape_cast %311 : vector<1xf32> to vector<1x1xf32>
    %313 = arith.addf %312, %306 : vector<1x1xf32>
    %c0_434 = arith.constant 0 : index
    %c0_435 = arith.constant 0 : index
    %314 = vector.load %arg8[%c0_434, %c0_435] : memref<2x1xf32, #tpu.memory_space<vmem>>, vector<1x1xf32>
    tpu.vector_store %arg8[%c0_434, %c0_435], %313 {strides = array<i32>} : memref<2x1xf32, #tpu.memory_space<vmem>>, vector<1x1xf32>,
    %315 = vector.extract_strided_slice %304 {offsets = [16, 0], sizes = [16, 16], strides = [1, 1]} : vector<32x16xf32> to vector<16x16xf32>
    %316 = arith.mulf %315, %305 : vector<16x16xf32>
    %cst_436 = arith.constant dense<0.000000e+00> : vector<16xf32>
    %317 = vector.multi_reduction <add>, %316, %cst_436 [0] : vector<16x16xf32> to vector<16xf32>
    %318 = vector.shape_cast %317 : vector<16xf32> to vector<1x16xf32>
    %cst_437 = arith.constant dense<0.000000e+00> : vector<1xf32>
    %319 = vector.multi_reduction <add>, %318, %cst_437 [1] : vector<1x16xf32> to vector<1xf32>
    %320 = vector.shape_cast %319 : vector<1xf32> to vector<1x1xf32>
    %321 = arith.addf %320, %306 : vector<1x1xf32>
    %c1_438 = arith.constant 1 : index
    %c0_439 = arith.constant 0 : index
    %322 = vector.load %arg8[%c1_438, %c0_439] : memref<2x1xf32, #tpu.memory_space<vmem>>, vector<1x1xf32>
    tpu.vector_store %arg8[%c1_438, %c0_439], %321 {strides = array<i32>} : memref<2x1xf32, #tpu.memory_space<vmem>>, vector<1x1xf32>,
    return
  }
  func.func @transform_0(%arg0: i32) -> (i32, i32) {
    %c0_i32 = arith.constant 0 : i32
    %c0_i32_0 = arith.constant 0 : i32
    %c0_i32_1 = arith.constant 0 : i32
    return %c0_i32, %c0_i32_0 : i32, i32
  }
  func.func @transform_1(%arg0: i32) -> (i32, i32) {
    %c0_i32 = arith.constant 0 : i32
    %c0_i32_0 = arith.constant 0 : i32
    %c0_i32_1 = arith.constant 0 : i32
    return %c0_i32, %c0_i32_0 : i32, i32
  }
  func.func @transform_2(%arg0: i32) -> (i32, i32) {
    %c0_i32 = arith.constant 0 : i32
    %c0_i32_0 = arith.constant 0 : i32
    %c0_i32_1 = arith.constant 0 : i32
    return %c0_i32, %c0_i32_0 : i32, i32
  }
  func.func @transform_3(%arg0: i32) -> (i32, i32) {
    %c0_i32 = arith.constant 0 : i32
    %c0_i32_0 = arith.constant 0 : i32
    %c0_i32_1 = arith.constant 0 : i32
    return %c0_i32, %c0_i32_0 : i32, i32
  }
  func.func @transform_4(%arg0: i32) -> (i32, i32) {
    %c0_i32 = arith.constant 0 : i32
    %c0_i32_0 = arith.constant 0 : i32
    %c0_i32_1 = arith.constant 0 : i32
    return %c0_i32, %c0_i32_0 : i32, i32
  }
  func.func @transform_5(%arg0: i32) -> (i32, i32) {
    %c0_i32 = arith.constant 0 : i32
    %c0_i32_0 = arith.constant 0 : i32
    %c0_i32_1 = arith.constant 0 : i32
    return %c0_i32, %c0_i32_0 : i32, i32
  }
  func.func @transform_6(%arg0: i32) -> (i32, i32) {
    %c0_i32 = arith.constant 0 : i32
    %c0_i32_0 = arith.constant 0 : i32
    %c0_i32_1 = arith.constant 0 : i32
    return %c0_i32, %c0_i32_0 : i32, i32
  }
  func.func @transform_7(%arg0: i32) -> (i32, i32) {
    %c0_i32 = arith.constant 0 : i32
    %c0_i32_0 = arith.constant 0 : i32
    %c0_i32_1 = arith.constant 0 : i32
    return %c0_i32, %c0_i32_0 : i32, i32
  }
}

</mosaic_0001>

<llo_original>
// kernel: _discriminator_forward.1
$region0: #{_discriminator_forward.1}
  #allocation0 [shape = 'u32[]', space=smem, size = 0x4, offset = 0x4, fixed_abs, tag = 'smem constant byte address 0x4 - core index']
  #allocation1 [shape = 'u32[144,128]{1,0:T(1,128)}', space=vmem, size = 0x12000, scoped, tag = 'internal scratch']
  #allocation2 [shape = 'f32[8,5,5,8]{3,2,1,0:T(8,128)}', space=vmem, size = 0x28000, scoped, tag = 'scratch operand']
  #allocation3 [shape = 'f32[1,1]{1,0:T(1,128)S(1)}', space=vmem, size = 0x200, scoped, tag = 'scoped memory for _discriminator_forward.1']
  %s0 = inlined_call_operand.vmem [shape: bf16[128,36], index: 0, kind: input, shape index: {}]
  %s1 = inlined_call_operand.vmem [shape: bf16[36,8], index: 1, kind: input, shape index: {}]
  %s2 = inlined_call_operand.vmem [shape: f32[1,8], index: 2, kind: input, shape index: {}]
  %s3 = inlined_call_operand.vmem [shape: bf16[72,16], index: 3, kind: input, shape index: {}]
  %s4 = inlined_call_operand.vmem [shape: f32[1,16], index: 4, kind: input, shape index: {}]
  %s5 = inlined_call_operand.vmem [shape: f32[16,16], index: 5, kind: input, shape index: {}]
  %s6 = inlined_call_operand.<no memory space> [shape: f32[1,1], index: 6, kind: input, shape index: {}]
  %s7 = inlined_call_operand.vmem [shape: f32[2,1], index: 7, kind: output, shape index: {}]
  %s8 = sld [smem:[#allocation0]]
  $region38: #{_discriminator_forward.1} parent=0
    _
  %s10 = ssub.s32 1, %s8
  %s11 = scalar_select 0, %s10, %s8
  %v12 = vstv %s6
  %13 = vst [vmem:[#allocation3] sm:$0x1] %v12
  // Predicated region
  $region2: #{_discriminator_forward.1} parent=0 // pred_check
    _
  $region3: #{_discriminator_forward.1} parent=0 // pred_check_branch
    %15 = sbr.rel (0) target = $region5
  $region4: #{_discriminator_forward.1} parent=0 // pred_region
    _
  $region5: #{_discriminator_forward.1} parent=0 // pred_fallthru
    _
  // Predicated region
  $region6: #{_discriminator_forward.1} parent=0 // pred_check
    _
  $region7: #{_discriminator_forward.1} parent=0 // pred_check_branch
    %17 = sbr.rel (0) target = $region9
  $region8: #{_discriminator_forward.1} parent=0 // pred_region
    _
  $region9: #{_discriminator_forward.1} parent=0 // pred_fallthru
    _
  // Predicated region
  $region10: #{_discriminator_forward.1} parent=0 // pred_check
    _
  $region11: #{_discriminator_forward.1} parent=0 // pred_check_branch
    %19 = sbr.rel (0) target = $region13
  $region12: #{_discriminator_forward.1} parent=0 // pred_region
    _
  $region13: #{_discriminator_forward.1} parent=0 // pred_fallthru
    _
  // Predicated region
  $region14: #{_discriminator_forward.1} parent=0 // pred_check
    _
  $region15: #{_discriminator_forward.1} parent=0 // pred_check_branch
    %21 = sbr.rel (0) target = $region17
  $region16: #{_discriminator_forward.1} parent=0 // pred_region
    _
  $region17: #{_discriminator_forward.1} parent=0 // pred_fallthru
    _
  // Predicated region
  $region18: #{_discriminator_forward.1} parent=0 // pred_check
    _
  $region19: #{_discriminator_forward.1} parent=0 // pred_check_branch
    %23 = sbr.rel (0) target = $region21
  $region20: #{_discriminator_forward.1} parent=0 // pred_region
    _
  $region21: #{_discriminator_forward.1} parent=0 // pred_fallthru
    _
  // Predicated region
  $region22: #{_discriminator_forward.1} parent=0 // pred_check
    _
  $region23: #{_discriminator_forward.1} parent=0 // pred_check_branch
    %25 = sbr.rel (0) target = $region25
  $region24: #{_discriminator_forward.1} parent=0 // pred_region
    _
  $region25: #{_discriminator_forward.1} parent=0 // pred_fallthru
    _
  // Predicated region
  $region26: #{_discriminator_forward.1} parent=0 // pred_check
    _
  $region27: #{_discriminator_forward.1} parent=0 // pred_check_branch
    %27 = sbr.rel (0) target = $region29
  $region28: #{_discriminator_forward.1} parent=0 // pred_region
    _
  $region29: #{_discriminator_forward.1} parent=0 // pred_fallthru
    _
  %v29 = vld [vmem:[%s0] sm:$0xf]
  %v30 = vld [vmem:[%s0 + $0x4] sm:$0xf]
  %v31 = vld [vmem:[%s0 + $0x8] sm:$0xf]
  %v32 = vld [vmem:[%s0 + $0xc] sm:$0xf]
  %v33 = vld [vmem:[%s0 + $0x10] sm:$0xf]
  %v34 = vld [vmem:[%s0 + $0x14] sm:$0xf]
  %v35 = vld [vmem:[%s0 + $0x18] sm:$0xf]
  %v36 = vld [vmem:[%s0 + $0x1c] sm:$0xf]
  %v37 = vld [vmem:[%s0 + $0x20] sm:$0xf]
  %v38 = vld [vmem:[%s0 + $0x24] sm:$0xf]
  %v39 = vld [vmem:[%s0 + $0x28] sm:$0xf]
  %v40 = vld [vmem:[%s0 + $0x2c] sm:$0xf]
  %v41 = vld [vmem:[%s0 + $0x30] sm:$0xf]
  %v42 = vld [vmem:[%s0 + $0x34] sm:$0xf]
  %v43 = vld [vmem:[%s0 + $0x38] sm:$0xf]
  %v44 = vld [vmem:[%s0 + $0x3c] sm:$0xf]
  %v45 = vld [vmem:[%s1] sm:$0xf]
  %v46 = vld [vmem:[%s1 + $0x4] sm:$0xf]
  %v47 = vld [vmem:[%s1 + $0x8] sm:$0xf]
  %v48 = vld [vmem:[%s1 + $0xc] sm:$0xf]
  %v49 = vld [vmem:[%s1 + $0x10] sm:$0x3]
  %v50 = vld [vmem:[%s2] sm:$0x1]
  %v52 = vlaneseq
  %v53 = vshrl.u32 %v52, 7
  %v54 = vsub.s32 0, %v53
  %v55 = vrot.slane %v50, %v54
  %v73 = vunpack.c.l.b16 %v29
  %v74 = vunpack.c.l.b16 %v30
  %v75 = vunpack.c.l.b16 %v31
  %v76 = vunpack.c.l.b16 %v32
  %v77 = vunpack.c.l.b16 %v33
  %v78 = vunpack.c.l.b16 %v34
  %v79 = vunpack.c.l.b16 %v35
  %v80 = vunpack.c.l.b16 %v36
  %v81 = vunpack.c.l.b16 %v37
  %v82 = vunpack.c.l.b16 %v38
  %v83 = vunpack.c.l.b16 %v39
  %v84 = vunpack.c.l.b16 %v40
  %v85 = vunpack.c.l.b16 %v41
  %v86 = vunpack.c.l.b16 %v42
  %v87 = vunpack.c.l.b16 %v43
  %v88 = vunpack.c.l.b16 %v44
  %v89 = vpack.c.b16 %v74, %v73
  %v90 = vpack.c.b16 %v76, %v75
  %v91 = vpack.c.b16 %v78, %v77
  %v92 = vpack.c.b16 %v80, %v79
  %v93 = vpack.c.b16 %v82, %v81
  %v94 = vpack.c.b16 %v84, %v83
  %v95 = vpack.c.b16 %v86, %v85
  %v96 = vpack.c.b16 %v88, %v87
  %v102 = vunpack.c.l.b16 %v45
  %v103 = vunpack.c.l.b16 %v46
  %v104 = vunpack.c.l.b16 %v47
  %v105 = vunpack.c.l.b16 %v48
  %v106 = vunpack.c.l.b16 %v49
  %v107 = vpack.c.b16 %v103, %v102
  %v108 = vpack.c.b16 %v105, %v104
  %v109 = vpack.c.b16 %v106, %v106
  %vm112 = vcmask 293888
  %v114 = vsel %vm112, %v89, 0
  %v117 = vsel %vm112, %v90, 0
  %v120 = vsel %vm112, %v91, 0
  %v123 = vsel %vm112, %v92, 0
  %v126 = vsel %vm112, %v93, 0
  %v129 = vsel %vm112, %v94, 0
  %v132 = vsel %vm112, %v95, 0
  %v135 = vsel %vm112, %v96, 0
  %vm137 = vcmask 1041408
  %v139 = vsel %vm137, %v109, 0
  %141 = vmatprep.subr.bf16.mxu0 0
  %142 = vmatpush1.bf16.msra.mxu0 %v107
  %143 = vmatprep.subr.bf16.mxu0 0
  %144 = vmatpush1.bf16.msra.mxu0 %v108
  %145 = vmatprep.subr.bf16.mxu0 0
  %146 = vmatpush1.bf16.msra.mxu0 %v139
  %147 = vmatprep.subr.bf16.mxu0 0
  %148 = vmatpush1.bf16.msra.mxu0 0
  %149 = vmatprep.subr.bf16.mxu0 0
  %150 = vmatpush1.bf16.msra.mxu0 0
  %151 = vmatprep.subr.bf16.mxu0 0
  %152 = vmatpush1.bf16.msra.mxu0 0
  %153 = vmatprep.subr.bf16.mxu0 0
  %154 = vmatpush1.bf16.msra.mxu0 0
  %155 = vmatprep.subr.bf16.mxu0 0
  %156 = vmatpush1.bf16.msra.mxu0 0
  %157 = vmatprep.subr.bf16.mxu0 0
  %158 = vmatpush1.bf16.msra.mxu0 0
  %159 = vmatprep.subr.bf16.mxu0 0
  %160 = vmatpush1.bf16.msra.mxu0 0
  %161 = vmatprep.subr.bf16.mxu0 0
  %162 = vmatpush1.bf16.msra.mxu0 0
  %163 = vmatprep.subr.bf16.mxu0 0
  %164 = vmatpush1.bf16.msra.mxu0 0
  %165 = vmatprep.subr.bf16.mxu0 0
  %166 = vmatpush1.bf16.msra.mxu0 0
  %167 = vmatprep.subr.bf16.mxu0 0
  %168 = vmatpush1.bf16.msra.mxu0 0
  %169 = vmatprep.subr.bf16.mxu0 0
  %170 = vmatpush1.bf16.msra.mxu0 0
  %171 = vmatprep.subr.bf16.mxu0 0
  %172 = vmatpush1.bf16.msra.mxu0 0
  %173 = vmatprep.mubr.bf16.mxu0 0
  %174 = vmatmul.mubr.bf16.gmra.mrb[0].mxu0 %v114
  %v175 = vpop.f32.mrb[0].mxu0
  %v176 = vadd.f32 %v55, %v175
  %v177 = vpop.f32.mrb[0].mxu0
  %v178 = vpop.f32.mrb[0].mxu0
  %v179 = vadd.f32 %v55, %v178
  %v180 = vpop.f32.mrb[0].mxu0
  %181 = vmatprep.mubr.bf16.mxu0 0
  %182 = vmatmul.mubr.bf16.gmra.mrb[0].mxu0 %v117
  %v183 = vpop.f32.mrb[0].mxu0
  %v184 = vadd.f32 %v55, %v183
  %v185 = vpop.f32.mrb[0].mxu0
  %v186 = vpop.f32.mrb[0].mxu0
  %v187 = vadd.f32 %v55, %v186
  %v188 = vpop.f32.mrb[0].mxu0
  %189 = vmatprep.mubr.bf16.mxu0 0
  %190 = vmatmul.mubr.bf16.gmra.mrb[0].mxu0 %v120
  %v191 = vpop.f32.mrb[0].mxu0
  %v192 = vadd.f32 %v55, %v191
  %v193 = vpop.f32.mrb[0].mxu0
  %v194 = vpop.f32.mrb[0].mxu0
  %v195 = vadd.f32 %v55, %v194
  %v196 = vpop.f32.mrb[0].mxu0
  %197 = vmatprep.mubr.bf16.mxu0 0
  %198 = vmatmul.mubr.bf16.gmra.mrb[0].mxu0 %v123
  %v199 = vpop.f32.mrb[0].mxu0
  %v200 = vadd.f32 %v55, %v199
  %v201 = vpop.f32.mrb[0].mxu0
  %v202 = vpop.f32.mrb[0].mxu0
  %v203 = vadd.f32 %v55, %v202
  %v204 = vpop.f32.mrb[0].mxu0
  %205 = vmatprep.mubr.bf16.mxu0 0
  %206 = vmatmul.mubr.bf16.gmra.mrb[0].mxu0 %v126
  %v207 = vpop.f32.mrb[0].mxu0
  %v208 = vadd.f32 %v55, %v207
  %v209 = vpop.f32.mrb[0].mxu0
  %v210 = vpop.f32.mrb[0].mxu0
  %v211 = vadd.f32 %v55, %v210
  %v212 = vpop.f32.mrb[0].mxu0
  %213 = vmatprep.mubr.bf16.mxu0 0
  %214 = vmatmul.mubr.bf16.gmra.mrb[0].mxu0 %v129
  %v215 = vpop.f32.mrb[0].mxu0
  %v216 = vadd.f32 %v55, %v215
  %v217 = vpop.f32.mrb[0].mxu0
  %v218 = vpop.f32.mrb[0].mxu0
  %v219 = vadd.f32 %v55, %v218
  %v220 = vpop.f32.mrb[0].mxu0
  %221 = vmatprep.mubr.bf16.mxu0 0
  %222 = vmatmul.mubr.bf16.gmra.mrb[0].mxu0 %v132
  %v223 = vpop.f32.mrb[0].mxu0
  %v224 = vadd.f32 %v55, %v223
  %v225 = vpop.f32.mrb[0].mxu0
  %v226 = vpop.f32.mrb[0].mxu0
  %v227 = vadd.f32 %v55, %v226
  %v228 = vpop.f32.mrb[0].mxu0
  %229 = vmatprep.mubr.bf16.mxu0 0
  %230 = vmatmul.mubr.bf16.gmra.mrb[0].mxu0 %v135
  %v231 = vpop.f32.mrb[0].mxu0
  %v232 = vadd.f32 %v55, %v231
  %v233 = vpop.f32.mrb[0].mxu0
  %v234 = vpop.f32.mrb[0].mxu0
  %v235 = vadd.f32 %v55, %v234
  %v236 = vpop.f32.mrb[0].mxu0
  %237 = vdwg.mxu0
  %vm238 = vcmp.ge.f32.partialorder %v176, 0.0
  %vm239 = vcmp.ge.f32.partialorder %v179, 0.0
  %vm240 = vcmp.ge.f32.partialorder %v184, 0.0
  %vm241 = vcmp.ge.f32.partialorder %v187, 0.0
  %vm242 = vcmp.ge.f32.partialorder %v192, 0.0
  %vm243 = vcmp.ge.f32.partialorder %v195, 0.0
  %vm244 = vcmp.ge.f32.partialorder %v200, 0.0
  %vm245 = vcmp.ge.f32.partialorder %v203, 0.0
  %vm246 = vcmp.ge.f32.partialorder %v208, 0.0
  %vm247 = vcmp.ge.f32.partialorder %v211, 0.0
  %vm248 = vcmp.ge.f32.partialorder %v216, 0.0
  %vm249 = vcmp.ge.f32.partialorder %v219, 0.0
  %vm250 = vcmp.ge.f32.partialorder %v224, 0.0
  %vm251 = vcmp.ge.f32.partialorder %v227, 0.0
  %vm252 = vcmp.ge.f32.partialorder %v232, 0.0
  %vm253 = vcmp.ge.f32.partialorder %v235, 0.0
  %v254 = vmul.f32 %v176, 0.2
  %v255 = vmul.f32 %v179, 0.2
  %v256 = vmul.f32 %v184, 0.2
  %v257 = vmul.f32 %v187, 0.2
  %v258 = vmul.f32 %v192, 0.2
  %v259 = vmul.f32 %v195, 0.2
  %v260 = vmul.f32 %v200, 0.2
  %v261 = vmul.f32 %v203, 0.2
  %v262 = vmul.f32 %v208, 0.2
  %v263 = vmul.f32 %v211, 0.2
  %v264 = vmul.f32 %v216, 0.2
  %v265 = vmul.f32 %v219, 0.2
  %v266 = vmul.f32 %v224, 0.2
  %v267 = vmul.f32 %v227, 0.2
  %v268 = vmul.f32 %v232, 0.2
  %v269 = vmul.f32 %v235, 0.2
  %v270 = vsel %vm238, %v176, %v254
  %v271 = vsel %vm239, %v179, %v255
  %v272 = vsel %vm240, %v184, %v256
  %v273 = vsel %vm241, %v187, %v257
  %v274 = vsel %vm242, %v192, %v258
  %v275 = vsel %vm243, %v195, %v259
  %v276 = vsel %vm244, %v200, %v260
  %v277 = vsel %vm245, %v203, %v261
  %v278 = vsel %vm246, %v208, %v262
  %v279 = vsel %vm247, %v211, %v263
  %v280 = vsel %vm248, %v216, %v264
  %v281 = vsel %vm249, %v219, %v265
  %v282 = vsel %vm250, %v224, %v266
  %v283 = vsel %vm251, %v227, %v267
  %v284 = vsel %vm252, %v232, %v268
  %v285 = vsel %vm253, %v235, %v269
  %vm286 = vcmask 61440
  %287 = vst.msk [vmem:[#allocation2] sm:$0x1f] %vm286, 0.0
  %288 = vst.msk [vmem:[#allocation2 + $0x8] sm:$0x1f] %vm286, 0.0
  %289 = vst.msk [vmem:[#allocation2 + $0x10] sm:$0x1f] %vm286, 0.0
  %290 = vst.msk [vmem:[#allocation2 + $0x18] sm:$0x1f] %vm286, 0.0
  %291 = vst.msk [vmem:[#allocation2 + $0x20] sm:$0x1f] %vm286, 0.0
  %292 = vst.msk [vmem:[#allocation2 + $0x28] sm:$0x1f] %vm286, 0.0
  %293 = vst.msk [vmem:[#allocation2 + $0x30] sm:$0x1f] %vm286, 0.0
  %294 = vst.msk [vmem:[#allocation2 + $0x38] sm:$0x1f] %vm286, 0.0
  %295 = vst.msk [vmem:[#allocation2 + $0x40] sm:$0x1f] %vm286, 0.0
  %296 = vst.msk [vmem:[#allocation2 + $0x48] sm:$0x1f] %vm286, 0.0
  %297 = vst.msk [vmem:[#allocation2 + $0x50] sm:$0x1f] %vm286, 0.0
  %298 = vst.msk [vmem:[#allocation2 + $0x58] sm:$0x1f] %vm286, 0.0
  %299 = vst.msk [vmem:[#allocation2 + $0x60] sm:$0x1f] %vm286, 0.0
  %300 = vst.msk [vmem:[#allocation2 + $0x68] sm:$0x1f] %vm286, 0.0
  %301 = vst.msk [vmem:[#allocation2 + $0x70] sm:$0x1f] %vm286, 0.0
  %302 = vst.msk [vmem:[#allocation2 + $0x78] sm:$0x1f] %vm286, 0.0
  %303 = vst.msk [vmem:[#allocation2 + $0x80] sm:$0x1f] %vm286, 0.0
  %304 = vst.msk [vmem:[#allocation2 + $0x88] sm:$0x1f] %vm286, 0.0
  %305 = vst.msk [vmem:[#allocation2 + $0x90] sm:$0x1f] %vm286, 0.0
  %306 = vst.msk [vmem:[#allocation2 + $0x98] sm:$0x1f] %vm286, 0.0
  %307 = vst.msk [vmem:[#allocation2 + $0xa0] sm:$0x1f] %vm286, 0.0
  %308 = vst.msk [vmem:[#allocation2 + $0xa8] sm:$0x1f] %vm286, 0.0
  %309 = vst.msk [vmem:[#allocation2 + $0xb0] sm:$0x1f] %vm286, 0.0
  %310 = vst.msk [vmem:[#allocation2 + $0xb8] sm:$0x1f] %vm286, 0.0
  %311 = vst.msk [vmem:[#allocation2 + $0xc0] sm:$0x1f] %vm286, 0.0
  %312 = vst.msk [vmem:[#allocation2 + $0xc8] sm:$0x1f] %vm286, 0.0
  %313 = vst.msk [vmem:[#allocation2 + $0xd0] sm:$0x1f] %vm286, 0.0
  %314 = vst.msk [vmem:[#allocation2 + $0xd8] sm:$0x1f] %vm286, 0.0
  %315 = vst.msk [vmem:[#allocation2 + $0xe0] sm:$0x1f] %vm286, 0.0
  %316 = vst.msk [vmem:[#allocation2 + $0xe8] sm:$0x1f] %vm286, 0.0
  %317 = vst.msk [vmem:[#allocation2 + $0xf0] sm:$0x1f] %vm286, 0.0
  %318 = vst.msk [vmem:[#allocation2 + $0xf8] sm:$0x1f] %vm286, 0.0
  %319 = vst.msk [vmem:[#allocation2 + $0x100] sm:$0x1f] %vm286, 0.0
  %320 = vst.msk [vmem:[#allocation2 + $0x108] sm:$0x1f] %vm286, 0.0
  %321 = vst.msk [vmem:[#allocation2 + $0x110] sm:$0x1f] %vm286, 0.0
  %322 = vst.msk [vmem:[#allocation2 + $0x118] sm:$0x1f] %vm286, 0.0
  %323 = vst.msk [vmem:[#allocation2 + $0x120] sm:$0x1f] %vm286, 0.0
  %324 = vst.msk [vmem:[#allocation2 + $0x128] sm:$0x1f] %vm286, 0.0
  %325 = vst.msk [vmem:[#allocation2 + $0x130] sm:$0x1f] %vm286, 0.0
  %326 = vst.msk [vmem:[#allocation2 + $0x138] sm:$0x1f] %vm286, 0.0
  %vm327 = vcmask 60416
  %328 = vst.msk [vmem:[#allocation2] sm:$0xf] %vm327, %v270
  %s329 = scalar_lea.vmem [#allocation2], 80
  %vm330 = vcmask 64516
  %331 = vst.msk [vmem:[%s329 - $0x3] sm:$0xf0] %vm330, %v270
  %s332 = scalar_lea.vmem [#allocation2], 168
  %333 = vst.msk [vmem:[%s332] sm:$0xf] %vm327, %v271
  %s334 = scalar_lea.vmem [#allocation2], 248
  %335 = vst.msk [vmem:[%s334 - $0x3] sm:$0xf0] %vm330, %v271
  %s336 = scalar_lea.vmem [#allocation2], 8
  %337 = vst.msk [vmem:[%s336] sm:$0xf] %vm327, %v272
  %s338 = scalar_lea.vmem [#allocation2], 88
  %339 = vst.msk [vmem:[%s338 - $0x3] sm:$0xf0] %vm330, %v272
  %s340 = scalar_lea.vmem [#allocation2], 176
  %341 = vst.msk [vmem:[%s340] sm:$0xf] %vm327, %v273
  %s342 = scalar_lea.vmem [#allocation2], 256
  %343 = vst.msk [vmem:[%s342 - $0x3] sm:$0xf0] %vm330, %v273
  %s344 = scalar_lea.vmem [#allocation2], 16
  %345 = vst.msk [vmem:[%s344] sm:$0xf] %vm327, %v274
  %s346 = scalar_lea.vmem [#allocation2], 96
  %347 = vst.msk [vmem:[%s346 - $0x3] sm:$0xf0] %vm330, %v274
  %s348 = scalar_lea.vmem [#allocation2], 184
  %349 = vst.msk [vmem:[%s348] sm:$0xf] %vm327, %v275
  %s350 = scalar_lea.vmem [#allocation2], 264
  %351 = vst.msk [vmem:[%s350 - $0x3] sm:$0xf0] %vm330, %v275
  %s352 = scalar_lea.vmem [#allocation2], 24
  %353 = vst.msk [vmem:[%s352] sm:$0xf] %vm327, %v276
  %s354 = scalar_lea.vmem [#allocation2], 104
  %355 = vst.msk [vmem:[%s354 - $0x3] sm:$0xf0] %vm330, %v276
  %s356 = scalar_lea.vmem [#allocation2], 192
  %357 = vst.msk [vmem:[%s356] sm:$0xf] %vm327, %v277
  %s358 = scalar_lea.vmem [#allocation2], 272
  %359 = vst.msk [vmem:[%s358 - $0x3] sm:$0xf0] %vm330, %v277
  %s360 = scalar_lea.vmem [#allocation2], 40
  %361 = vst.msk [vmem:[%s360] sm:$0xf] %vm327, %v278
  %s362 = scalar_lea.vmem [#allocation2], 120
  %363 = vst.msk [vmem:[%s362 - $0x3] sm:$0xf0] %vm330, %v278
  %s364 = scalar_lea.vmem [#allocation2], 208
  %365 = vst.msk [vmem:[%s364] sm:$0xf] %vm327, %v279
  %s366 = scalar_lea.vmem [#allocation2], 288
  %367 = vst.msk [vmem:[%s366 - $0x3] sm:$0xf0] %vm330, %v279
  %s368 = scalar_lea.vmem [#allocation2], 48
  %369 = vst.msk [vmem:[%s368] sm:$0xf] %vm327, %v280
  %s370 = scalar_lea.vmem [#allocation2], 128
  %371 = vst.msk [vmem:[%s370 - $0x3] sm:$0xf0] %vm330, %v280
  %s372 = scalar_lea.vmem [#allocation2], 216
  %373 = vst.msk [vmem:[%s372] sm:$0xf] %vm327, %v281
  %s374 = scalar_lea.vmem [#allocation2], 296
  %375 = vst.msk [vmem:[%s374 - $0x3] sm:$0xf0] %vm330, %v281
  %s376 = scalar_lea.vmem [#allocation2], 56
  %377 = vst.msk [vmem:[%s376] sm:$0xf] %vm327, %v282
  %s378 = scalar_lea.vmem [#allocation2], 136
  %379 = vst.msk [vmem:[%s378 - $0x3] sm:$0xf0] %vm330, %v282
  %s380 = scalar_lea.vmem [#allocation2], 224
  %381 = vst.msk [vmem:[%s380] sm:$0xf] %vm327, %v283
  %s382 = scalar_lea.vmem [#allocation2], 304
  %383 = vst.msk [vmem:[%s382 - $0x3] sm:$0xf0] %vm330, %v283
  %s384 = scalar_lea.vmem [#allocation2], 64
  %385 = vst.msk [vmem:[%s384] sm:$0xf] %vm327, %v284
  %s386 = scalar_lea.vmem [#allocation2], 144
  %387 = vst.msk [vmem:[%s386 - $0x3] sm:$0xf0] %vm330, %v284
  %s388 = scalar_lea.vmem [#allocation2], 232
  %389 = vst.msk [vmem:[%s388] sm:$0xf] %vm327, %v285
  %s390 = scalar_lea.vmem [#allocation2], 312
  %391 = vst.msk [vmem:[%s390 - $0x3] sm:$0xf0] %vm330, %v285
  %v392 = vld [vmem:[%s3] sm:$0xf]
  %v393 = vld [vmem:[%s3 + $0x4] sm:$0xf]
  %v394 = vld [vmem:[%s3 + $0x8] sm:$0xf]
  %v395 = vld [vmem:[%s3 + $0xc] sm:$0xf]
  %v396 = vld [vmem:[%s3 + $0x10] sm:$0xf]
  %v397 = vld [vmem:[%s3 + $0x14] sm:$0xf]
  %v398 = vld [vmem:[%s3 + $0x18] sm:$0xf]
  %v399 = vld [vmem:[%s3 + $0x1c] sm:$0xf]
  %v400 = vld [vmem:[%s3 + $0x20] sm:$0xf]
  %v401 = vld [vmem:[%s4] sm:$0x1]
  %s402 = scalar_lea.vmem [#allocation2], 240
  %v403 = vld [vmem:[%s402] sm:$0xf]
  %s404 = scalar_lea.vmem [#allocation2], 160
  %v405 = vld [vmem:[%s404] sm:$0xf]
  %v406 = vld [vmem:[%s402 + $0x1] sm:$0xf]
  %v407 = vld [vmem:[%s329] sm:$0xf]
  %v408 = vld [vmem:[#allocation2] sm:$0xf]
  %v409 = vld [vmem:[%s329 + $0x1] sm:$0xf]
  %v410 = vld [vmem:[%s334] sm:$0xf]
  %v411 = vld [vmem:[%s332] sm:$0xf]
  %v412 = vld [vmem:[%s334 + $0x1] sm:$0xf]
  %414 = vrot.lane.b32.xlu0 %v405, 8
  %v415 = vpop.permute.xlu0 %414
  %418 = vrot.lane.b32.xlu0 %v406, 16
  %v419 = vpop.permute.xlu0 %418
  %422 = vrot.lane.b32.xlu0 %v407, 24
  %v423 = vpop.permute.xlu0 %422
  %426 = vrot.lane.b32.xlu0 %v408, 32
  %v427 = vpop.permute.xlu0 %426
  %430 = vrot.lane.b32.xlu0 %v409, 40
  %v431 = vpop.permute.xlu0 %430
  %434 = vrot.lane.b32.xlu0 %v410, 48
  %v435 = vpop.permute.xlu0 %434
  %438 = vrot.lane.b32.xlu0 %v411, 56
  %v439 = vpop.permute.xlu0 %438
  %442 = vrot.lane.b32.xlu0 %v412, 64
  %v443 = vpop.permute.xlu0 %442
  %vm445 = vcmask 64512
  %v446 = vsel %vm445, %v403, %v415
  %vm447 = vcmask 130048
  %v448 = vsel %vm447, %v446, %v419
  %vm449 = vcmask 195584
  %v450 = vsel %vm449, %v448, %v423
  %vm451 = vcmask 261120
  %v452 = vsel %vm451, %v450, %v427
  %vm453 = vcmask 326656
  %v454 = vsel %vm453, %v452, %v431
  %vm455 = vcmask 392192
  %v456 = vsel %vm455, %v454, %v435
  %vm457 = vcmask 457728
  %v458 = vsel %vm457, %v456, %v439
  %vm459 = vcmask 523264
  %v460 = vsel %vm459, %v458, %v443
  %v461 = vld [vmem:[%s338] sm:$0xf]
  %v462 = vld [vmem:[%s336] sm:$0xf]
  %v463 = vld [vmem:[%s338 + $0x1] sm:$0xf]
  %v464 = vld [vmem:[%s342] sm:$0xf]
  %v465 = vld [vmem:[%s340] sm:$0xf]
  %v466 = vld [vmem:[%s342 + $0x1] sm:$0xf]
  %467 = vrot.lane.b32.xlu0 %v411, 8
  %v468 = vpop.permute.xlu0 %467
  %470 = vrot.lane.b32.xlu0 %v412, 16
  %v471 = vpop.permute.xlu0 %470
  %474 = vrot.lane.b32.xlu0 %v461, 24
  %v475 = vpop.permute.xlu0 %474
  %478 = vrot.lane.b32.xlu0 %v462, 32
  %v479 = vpop.permute.xlu0 %478
  %482 = vrot.lane.b32.xlu0 %v463, 40
  %v483 = vpop.permute.xlu0 %482
  %486 = vrot.lane.b32.xlu0 %v464, 48
  %v487 = vpop.permute.xlu0 %486
  %490 = vrot.lane.b32.xlu0 %v465, 56
  %v491 = vpop.permute.xlu0 %490
  %494 = vrot.lane.b32.xlu0 %v466, 64
  %v495 = vpop.permute.xlu0 %494
  %v497 = vsel %vm445, %v410, %v468
  %v498 = vsel %vm447, %v497, %v471
  %v499 = vsel %vm449, %v498, %v475
  %v500 = vsel %vm451, %v499, %v479
  %v501 = vsel %vm453, %v500, %v483
  %v502 = vsel %vm455, %v501, %v487
  %v503 = vsel %vm457, %v502, %v491
  %v504 = vsel %vm459, %v503, %v495
  %v505 = vld [vmem:[%s346] sm:$0xf]
  %v506 = vld [vmem:[%s344] sm:$0xf]
  %v507 = vld [vmem:[%s346 + $0x1] sm:$0xf]
  %v508 = vld [vmem:[%s350] sm:$0xf]
  %v509 = vld [vmem:[%s348] sm:$0xf]
  %v510 = vld [vmem:[%s350 + $0x1] sm:$0xf]
  %511 = vrot.lane.b32.xlu0 %v465, 8
  %v512 = vpop.permute.xlu0 %511
  %514 = vrot.lane.b32.xlu0 %v466, 16
  %v515 = vpop.permute.xlu0 %514
  %518 = vrot.lane.b32.xlu0 %v505, 24
  %v519 = vpop.permute.xlu0 %518
  %522 = vrot.lane.b32.xlu0 %v506, 32
  %v523 = vpop.permute.xlu0 %522
  %526 = vrot.lane.b32.xlu0 %v507, 40
  %v527 = vpop.permute.xlu0 %526
  %530 = vrot.lane.b32.xlu0 %v508, 48
  %v531 = vpop.permute.xlu0 %530
  %534 = vrot.lane.b32.xlu0 %v509, 56
  %v535 = vpop.permute.xlu0 %534
  %538 = vrot.lane.b32.xlu0 %v510, 64
  %v539 = vpop.permute.xlu0 %538
  %v541 = vsel %vm445, %v464, %v512
  %v542 = vsel %vm447, %v541, %v515
  %v543 = vsel %vm449, %v542, %v519
  %v544 = vsel %vm451, %v543, %v523
  %v545 = vsel %vm453, %v544, %v527
  %v546 = vsel %vm455, %v545, %v531
  %v547 = vsel %vm457, %v546, %v535
  %v548 = vsel %vm459, %v547, %v539
  %v549 = vld [vmem:[%s354] sm:$0xf]
  %v550 = vld [vmem:[%s352] sm:$0xf]
  %v551 = vld [vmem:[%s354 + $0x1] sm:$0xf]
  %v552 = vld [vmem:[%s358] sm:$0xf]
  %v553 = vld [vmem:[%s356] sm:$0xf]
  %v554 = vld [vmem:[%s358 + $0x1] sm:$0xf]
  %555 = vrot.lane.b32.xlu0 %v509, 8
  %v556 = vpop.permute.xlu0 %555
  %558 = vrot.lane.b32.xlu0 %v510, 16
  %v559 = vpop.permute.xlu0 %558
  %562 = vrot.lane.b32.xlu0 %v549, 24
  %v563 = vpop.permute.xlu0 %562
  %566 = vrot.lane.b32.xlu0 %v550, 32
  %v567 = vpop.permute.xlu0 %566
  %570 = vrot.lane.b32.xlu0 %v551, 40
  %v571 = vpop.permute.xlu0 %570
  %574 = vrot.lane.b32.xlu0 %v552, 48
  %v575 = vpop.permute.xlu0 %574
  %578 = vrot.lane.b32.xlu0 %v553, 56
  %v579 = vpop.permute.xlu0 %578
  %582 = vrot.lane.b32.xlu0 %v554, 64
  %v583 = vpop.permute.xlu0 %582
  %v585 = vsel %vm445, %v508, %v556
  %v586 = vsel %vm447, %v585, %v559
  %v587 = vsel %vm449, %v586, %v563
  %v588 = vsel %vm451, %v587, %v567
  %v589 = vsel %vm453, %v588, %v571
  %v590 = vsel %vm455, %v589, %v575
  %v591 = vsel %vm457, %v590, %v579
  %v592 = vsel %vm459, %v591, %v583
  %s593 = scalar_lea.vmem [#allocation2], 280
  %v594 = vld [vmem:[%s593] sm:$0xf]
  %s595 = scalar_lea.vmem [#allocation2], 200
  %v596 = vld [vmem:[%s595] sm:$0xf]
  %v597 = vld [vmem:[%s593 + $0x1] sm:$0xf]
  %v598 = vld [vmem:[%s362] sm:$0xf]
  %v599 = vld [vmem:[%s360] sm:$0xf]
  %v600 = vld [vmem:[%s362 + $0x1] sm:$0xf]
  %v601 = vld [vmem:[%s366] sm:$0xf]
  %v602 = vld [vmem:[%s364] sm:$0xf]
  %v603 = vld [vmem:[%s366 + $0x1] sm:$0xf]
  %605 = vrot.lane.b32.xlu0 %v596, 8
  %v606 = vpop.permute.xlu0 %605
  %609 = vrot.lane.b32.xlu0 %v597, 16
  %v610 = vpop.permute.xlu0 %609
  %613 = vrot.lane.b32.xlu0 %v598, 24
  %v614 = vpop.permute.xlu0 %613
  %617 = vrot.lane.b32.xlu0 %v599, 32
  %v618 = vpop.permute.xlu0 %617
  %621 = vrot.lane.b32.xlu0 %v600, 40
  %v622 = vpop.permute.xlu0 %621
  %625 = vrot.lane.b32.xlu0 %v601, 48
  %v626 = vpop.permute.xlu0 %625
  %629 = vrot.lane.b32.xlu0 %v602, 56
  %v630 = vpop.permute.xlu0 %629
  %633 = vrot.lane.b32.xlu0 %v603, 64
  %v634 = vpop.permute.xlu0 %633
  %v636 = vsel %vm445, %v594, %v606
  %v637 = vsel %vm447, %v636, %v610
  %v638 = vsel %vm449, %v637, %v614
  %v639 = vsel %vm451, %v638, %v618
  %v640 = vsel %vm453, %v639, %v622
  %v641 = vsel %vm455, %v640, %v626
  %v642 = vsel %vm457, %v641, %v630
  %v643 = vsel %vm459, %v642, %v634
  %v644 = vld [vmem:[%s370] sm:$0xf]
  %v645 = vld [vmem:[%s368] sm:$0xf]
  %v646 = vld [vmem:[%s370 + $0x1] sm:$0xf]
  %v647 = vld [vmem:[%s374] sm:$0xf]
  %v648 = vld [vmem:[%s372] sm:$0xf]
  %v649 = vld [vmem:[%s374 + $0x1] sm:$0xf]
  %650 = vrot.lane.b32.xlu0 %v602, 8
  %v651 = vpop.permute.xlu0 %650
  %653 = vrot.lane.b32.xlu0 %v603, 16
  %v654 = vpop.permute.xlu0 %653
  %657 = vrot.lane.b32.xlu0 %v644, 24
  %v658 = vpop.permute.xlu0 %657
  %661 = vrot.lane.b32.xlu0 %v645, 32
  %v662 = vpop.permute.xlu0 %661
  %665 = vrot.lane.b32.xlu0 %v646, 40
  %v666 = vpop.permute.xlu0 %665
  %669 = vrot.lane.b32.xlu0 %v647, 48
  %v670 = vpop.permute.xlu0 %669
  %673 = vrot.lane.b32.xlu0 %v648, 56
  %v674 = vpop.permute.xlu0 %673
  %677 = vrot.lane.b32.xlu0 %v649, 64
  %v678 = vpop.permute.xlu0 %677
  %v680 = vsel %vm445, %v601, %v651
  %v681 = vsel %vm447, %v680, %v654
  %v682 = vsel %vm449, %v681, %v658
  %v683 = vsel %vm451, %v682, %v662
  %v684 = vsel %vm453, %v683, %v666
  %v685 = vsel %vm455, %v684, %v670
  %v686 = vsel %vm457, %v685, %v674
  %v687 = vsel %vm459, %v686, %v678
  %v688 = vld [vmem:[%s378] sm:$0xf]
  %v689 = vld [vmem:[%s376] sm:$0xf]
  %v690 = vld [vmem:[%s378 + $0x1] sm:$0xf]
  %v691 = vld [vmem:[%s382] sm:$0xf]
  %v692 = vld [vmem:[%s380] sm:$0xf]
  %v693 = vld [vmem:[%s382 + $0x1] sm:$0xf]
  %694 = vrot.lane.b32.xlu0 %v648, 8
  %v695 = vpop.permute.xlu0 %694
  %697 = vrot.lane.b32.xlu0 %v649, 16
  %v698 = vpop.permute.xlu0 %697
  %701 = vrot.lane.b32.xlu0 %v688, 24
  %v702 = vpop.permute.xlu0 %701
  %705 = vrot.lane.b32.xlu0 %v689, 32
  %v706 = vpop.permute.xlu0 %705
  %709 = vrot.lane.b32.xlu0 %v690, 40
  %v710 = vpop.permute.xlu0 %709
  %713 = vrot.lane.b32.xlu0 %v691, 48
  %v714 = vpop.permute.xlu0 %713
  %717 = vrot.lane.b32.xlu0 %v692, 56
  %v718 = vpop.permute.xlu0 %717
  %721 = vrot.lane.b32.xlu0 %v693, 64
  %v722 = vpop.permute.xlu0 %721
  %v724 = vsel %vm445, %v647, %v695
  %v725 = vsel %vm447, %v724, %v698
  %v726 = vsel %vm449, %v725, %v702
  %v727 = vsel %vm451, %v726, %v706
  %v728 = vsel %vm453, %v727, %v710
  %v729 = vsel %vm455, %v728, %v714
  %v730 = vsel %vm457, %v729, %v718
  %v731 = vsel %vm459, %v730, %v722
  %v732 = vld [vmem:[%s386] sm:$0xf]
  %v733 = vld [vmem:[%s384] sm:$0xf]
  %v734 = vld [vmem:[%s386 + $0x1] sm:$0xf]
  %v735 = vld [vmem:[%s390] sm:$0xf]
  %v736 = vld [vmem:[%s388] sm:$0xf]
  %v737 = vld [vmem:[%s390 + $0x1] sm:$0xf]
  %738 = vrot.lane.b32.xlu0 %v692, 8
  %v739 = vpop.permute.xlu0 %738
  %741 = vrot.lane.b32.xlu0 %v693, 16
  %v742 = vpop.permute.xlu0 %741
  %745 = vrot.lane.b32.xlu0 %v732, 24
  %v746 = vpop.permute.xlu0 %745
  %749 = vrot.lane.b32.xlu0 %v733, 32
  %v750 = vpop.permute.xlu0 %749
  %753 = vrot.lane.b32.xlu0 %v734, 40
  %v754 = vpop.permute.xlu0 %753
  %757 = vrot.lane.b32.xlu0 %v735, 48
  %v758 = vpop.permute.xlu0 %757
  %761 = vrot.lane.b32.xlu0 %v736, 56
  %v762 = vpop.permute.xlu0 %761
  %765 = vrot.lane.b32.xlu0 %v737, 64
  %v766 = vpop.permute.xlu0 %765
  %v768 = vsel %vm445, %v691, %v739
  %v769 = vsel %vm447, %v768, %v742
  %v770 = vsel %vm449, %v769, %v746
  %v771 = vsel %vm451, %v770, %v750
  %v772 = vsel %vm453, %v771, %v754
  %v773 = vsel %vm455, %v772, %v758
  %v774 = vsel %vm457, %v773, %v762
  %v775 = vsel %vm459, %v774, %v766
  %v777 = vrot.slane %v504, 4
  %v780 = vrot.slane %v592, 4
  %v783 = vrot.slane %v687, 4
  %v786 = vrot.slane %v775, 4
  %vm788 = vcmask 1043456
  %v789 = vsel %vm788, %v460, %v777
  %v790 = vsel %vm788, %v548, %v780
  %v791 = vsel %vm788, %v643, %v783
  %v792 = vsel %vm788, %v731, %v786
  %v793 = vpack.c.bf16 %v790, %v789
  %v794 = vpack.c.bf16 %v792, %v791
  %v796 = vlaneseq
  %v797 = vshrl.u32 %v796, 7
  %v798 = vsub.s32 0, %v797
  %v799 = vrot.slane %v401, %v798
  %v810 = vunpack.c.l.b16 %v392
  %v811 = vunpack.c.l.b16 %v393
  %v812 = vunpack.c.l.b16 %v394
  %v813 = vunpack.c.l.b16 %v395
  %v814 = vunpack.c.l.b16 %v396
  %v815 = vunpack.c.l.b16 %v397
  %v816 = vunpack.c.l.b16 %v398
  %v817 = vunpack.c.l.b16 %v399
  %v818 = vunpack.c.l.b16 %v400
  %v819 = vpack.c.b16 %v811, %v810
  %v820 = vpack.c.b16 %v813, %v812
  %v821 = vpack.c.b16 %v815, %v814
  %v822 = vpack.c.b16 %v817, %v816
  %v823 = vpack.c.b16 %v818, %v818
  %vm828 = vcmask 588800
  %v830 = vsel %vm828, %v793, 0
  %v833 = vsel %vm828, %v794, 0
  %v836 = vsel %vm788, %v823, 0
  %838 = vmatprep.subr.bf16.mxu0 0
  %839 = vmatpush1.bf16.msra.mxu0 %v819
  %840 = vmatprep.subr.bf16.mxu0 0
  %841 = vmatpush1.bf16.msra.mxu0 %v820
  %842 = vmatprep.subr.bf16.mxu0 0
  %843 = vmatpush1.bf16.msra.mxu0 %v821
  %844 = vmatprep.subr.bf16.mxu0 0
  %845 = vmatpush1.bf16.msra.mxu0 %v822
  %846 = vmatprep.subr.bf16.mxu0 0
  %847 = vmatpush1.bf16.msra.mxu0 %v836
  %848 = vmatprep.subr.bf16.mxu0 0
  %849 = vmatpush1.bf16.msra.mxu0 0
  %850 = vmatprep.subr.bf16.mxu0 0
  %851 = vmatpush1.bf16.msra.mxu0 0
  %852 = vmatprep.subr.bf16.mxu0 0
  %853 = vmatpush1.bf16.msra.mxu0 0
  %854 = vmatprep.subr.bf16.mxu0 0
  %855 = vmatpush1.bf16.msra.mxu0 0
  %856 = vmatprep.subr.bf16.mxu0 0
  %857 = vmatpush1.bf16.msra.mxu0 0
  %858 = vmatprep.subr.bf16.mxu0 0
  %859 = vmatpush1.bf16.msra.mxu0 0
  %860 = vmatprep.subr.bf16.mxu0 0
  %861 = vmatpush1.bf16.msra.mxu0 0
  %862 = vmatprep.subr.bf16.mxu0 0
  %863 = vmatpush1.bf16.msra.mxu0 0
  %864 = vmatprep.subr.bf16.mxu0 0
  %865 = vmatpush1.bf16.msra.mxu0 0
  %866 = vmatprep.subr.bf16.mxu0 0
  %867 = vmatpush1.bf16.msra.mxu0 0
  %868 = vmatprep.subr.bf16.mxu0 0
  %869 = vmatpush1.bf16.msra.mxu0 0
  %870 = vmatprep.mubr.bf16.mxu0 0
  %871 = vmatmul.mubr.bf16.gmra.mrb[0].mxu0 %v830
  %v872 = vpop.f32.mrb[0].mxu0
  %v873 = vadd.f32 %v799, %v872
  %v874 = vpop.f32.mrb[0].mxu0
  %v875 = vpop.f32.mrb[0].mxu0
  %v876 = vadd.f32 %v799, %v875
  %v877 = vpop.f32.mrb[0].mxu0
  %878 = vmatprep.mubr.bf16.mxu0 0
  %879 = vmatmul.mubr.bf16.gmra.mrb[0].mxu0 %v833
  %v880 = vpop.f32.mrb[0].mxu0
  %v881 = vadd.f32 %v799, %v880
  %v882 = vpop.f32.mrb[0].mxu0
  %v883 = vpop.f32.mrb[0].mxu0
  %v884 = vadd.f32 %v799, %v883
  %v885 = vpop.f32.mrb[0].mxu0
  %886 = vdwg.mxu0
  %vm887 = vcmp.ge.f32.partialorder %v873, 0.0
  %vm888 = vcmp.ge.f32.partialorder %v876, 0.0
  %vm889 = vcmp.ge.f32.partialorder %v881, 0.0
  %vm890 = vcmp.ge.f32.partialorder %v884, 0.0
  %v891 = vmul.f32 %v873, 0.2
  %v892 = vmul.f32 %v876, 0.2
  %v893 = vmul.f32 %v881, 0.2
  %v894 = vmul.f32 %v884, 0.2
  %v895 = vsel %vm887, %v873, %v891
  %v896 = vsel %vm888, %v876, %v892
  %v897 = vsel %vm889, %v881, %v893
  %v898 = vsel %vm890, %v884, %v894
  %v899 = vld [vmem:[%s5] sm:$0xff]
  %v900 = vld [vmem:[%s5 + $0x8] sm:$0xff]
  %v901 = vld [vmem:[#allocation3] sm:$0x1]
  %v902 = vmul.f32 %v895, %v899
  %v903 = vmul.f32 %v896, %v900
  %v904 = vsel %vm447, %v902, 0.0
  %v905 = vsel %vm447, %v903, 0.0
  %v906 = vadd.f32 %v904, %v905
  %v907 = vrot.slane %v906, 4
  %v908 = vadd.f32 %v906, %v907
  %v909 = vrot.slane %v908, 2
  %v910 = vadd.f32 %v908, %v909
  %v911 = vrot.slane %v910, 1
  %v912 = vadd.f32 %v910, %v911
  %v913 = vsel %vm447, %v912, 0.0
  %914 = vadd.xlane.f32.xlu0 %v913
  %v915 = vpop.xlane.xlu0 %914
  %v916 = vadd.f32 %v915, %v901
  %vm917 = vcmask 0
  %918 = vst.msk [vmem:[%s7] sm:$0x1] %vm917, %v916
  %v919 = vmul.f32 %v897, %v899
  %v920 = vmul.f32 %v898, %v900
  %v921 = vsel %vm447, %v919, 0.0
  %v922 = vsel %vm447, %v920, 0.0
  %v923 = vadd.f32 %v921, %v922
  %v924 = vrot.slane %v923, 4
  %v925 = vadd.f32 %v923, %v924
  %v926 = vrot.slane %v925, 2
  %v927 = vadd.f32 %v925, %v926
  %v928 = vrot.slane %v927, 1
  %v929 = vadd.f32 %v927, %v928
  %v930 = vsel %vm447, %v929, 0.0
  %931 = vadd.xlane.f32.xlu0 %v930
  %v932 = vpop.xlane.xlu0 %931
  %v933 = vadd.f32 %v932, %v901
  %934 = vst.msk [vmem:[%s7 + $0x1] sm:$0x1] %vm917, %v933
  // Predicated region
  $region30: #{_discriminator_forward.1} parent=0 // pred_check
    _
  $region31: #{_discriminator_forward.1} parent=0 // pred_check_branch
    %936 = sbr.rel (0) target = $region33
  $region32: #{_discriminator_forward.1} parent=0 // pred_region
    _
  $region33: #{_discriminator_forward.1} parent=0 // pred_fallthru
    _
  // Predicated region
  $region34: #{_discriminator_forward.1} parent=0 // pred_check
    _
  $region35: #{_discriminator_forward.1} parent=0 // pred_check_branch
    %938 = sbr.rel (0) target = $region37
  $region36: #{_discriminator_forward.1} parent=0 // pred_region
    _
  $region37: #{_discriminator_forward.1} parent=0 // pred_fallthru
    _

</llo_original>
